<compile_context>
chip_gen: v5e
topology: v5e:2x2
jax: 0.10.0
libtpu: 0.0.40
codegen_flags: <defaults>
</compile_context>

<pallas_src>
import functools
import math

import jax
import jax.numpy as jnp
from jax import lax
from jax.experimental import pallas as pl
from jax.experimental.pallas import tpu as pltpu

LN_EPS = 1e-5  # PyTorch nn.LayerNorm default


def _layernorm(x, gamma, beta):
    mu = jnp.mean(x, axis=-1, keepdims=True)
    var = jnp.mean(jnp.square(x - mu), axis=-1, keepdims=True)
    return (x - mu) * lax.rsqrt(var + LN_EPS) * gamma + beta


def _gelu_exact(x):
    # PyTorch nn.GELU() default: exact erf-based GELU.
    return 0.5 * x * (1.0 + lax.erf(x / math.sqrt(2.0)))


def _bf(x):
    return x.astype(jnp.bfloat16)


# ----------------------------------------------------------------------------
# Fused whole-transformer kernel.
# Grid = (batch, depth).  The residual stream lives in a VMEM scratch across
# the depth axis; the final LayerNorm is applied on the last depth step.
# ----------------------------------------------------------------------------
def transformer_kernel(x_ref,
                       ln1g_ref, ln1b_ref, wqkv_ref, wo_ref, bo_ref,
                       ln2g_ref, ln2b_ref, w1_ref, fb1_ref, w2_ref, fb2_ref,
                       lnfg_ref, lnfb_ref,
                       o_ref, res_ref, *, heads, dim_head, scale):
    layer = pl.program_id(1)
    depth = pl.num_programs(1)
    inner = heads * dim_head

    # Load the input activation into the carried residual stream on layer 0.
    @pl.when(layer == 0)
    def _():
        res_ref[...] = x_ref[0].astype(jnp.float32)

    x = res_ref[...]                                          # (N, D) f32

    # ---------------- attention ----------------
    xn = _layernorm(x, ln1g_ref[0], ln1b_ref[0])              # (N, D) f32
    # Single fused QKV projection (lane-dense, full-depth K=D contraction).
    qkv = jnp.dot(_bf(xn), wqkv_ref[0],
                  preferred_element_type=jnp.float32)         # (N, 3*inner) f32

    # Per-head softmax(Q K^T) V, 2-D ops only; scores/exp/normalize fused so a
    # single (N, N) f32 tensor is live per head.
    ctx_parts = []
    for h in range(heads):
        s = h * dim_head
        qh = _bf(qkv[:, s:s + dim_head] * scale)              # (N, dh) bf16
        kh = _bf(qkv[:, inner + s:inner + s + dim_head])
        vh = _bf(qkv[:, 2 * inner + s:2 * inner + s + dim_head])

        d = jnp.einsum('nd,md->nm', qh, kh,
                       preferred_element_type=jnp.float32)    # (N, N) f32
        d = d - jnp.max(d, axis=-1, keepdims=True)
        e = jnp.exp(d)
        p = (e * pl.reciprocal(jnp.sum(e, axis=-1, keepdims=True), approx=True)
             ).astype(jnp.bfloat16)                           # (N, N) bf16
        ctx_parts.append(jnp.dot(p, vh,
                                 preferred_element_type=jnp.float32))  # (N, dh)
    ctx = jnp.concatenate(ctx_parts, axis=-1)                 # (N, inner) f32

    # Single output projection (N, inner) @ (inner, D).
    y = jnp.dot(_bf(ctx), wo_ref[0],
                preferred_element_type=jnp.float32) + bo_ref[0]
    x = x + y                                                 # residual

    # ---------------- feed-forward ----------------
    xn = _layernorm(x, ln2g_ref[0], ln2b_ref[0])
    hdn = jnp.dot(_bf(xn), w1_ref[0],
                  preferred_element_type=jnp.float32) + fb1_ref[0]
    hdn = _gelu_exact(hdn)
    y2 = jnp.dot(_bf(hdn), w2_ref[0],
                 preferred_element_type=jnp.float32) + fb2_ref[0]
    x = x + y2                                                # residual

    res_ref[...] = x

    # Fused final LayerNorm + output writeback on the last layer only.
    @pl.when(layer == depth - 1)
    def _():
        o_ref[0] = _layernorm(x, lnfg_ref[0], lnfb_ref[0]).astype(o_ref.dtype)


# ----------------------------------------------------------------------------
# Wrapper
# ----------------------------------------------------------------------------
def _vmem_limit_bytes():
    """~75% of physical VMEM: 48 MiB on v7x (64 MiB), 96 MiB on v5e/v6e (128 MiB)."""
    try:
        cap = int(pltpu.get_tpu_info().vmem_capacity_bytes)
    except Exception:
        cap = 64 * 1024 * 1024
    return int(min(cap * 3 // 4, 100 * 1024 * 1024))


def transformer_forward(x, kp, *, heads, dim_head, mlp_dim):
    B, N, D = x.shape
    inner = heads * dim_head
    depth = kp["wqkv"].shape[0]

    kernel = functools.partial(transformer_kernel, heads=heads,
                               dim_head=dim_head, scale=dim_head ** -0.5)

    # Block index maps take the grid coords (b, l).
    act = pl.BlockSpec((1, N, D), lambda b, l: (b, 0, 0))

    def layer_vec(C):
        return pl.BlockSpec((1, 1, C), lambda b, l: (l, 0, 0))

    def layer_mat(R, C):
        return pl.BlockSpec((1, R, C), lambda b, l: (l, 0, 0))

    def const_vec(C):
        return pl.BlockSpec((1, 1, C), lambda b, l: (0, 0, 0))

    flops = int(2 * depth * B * N * (3 * D * inner          # fused QKV projection
                                     + 2 * N * inner        # QK^T and PV over heads
                                     + inner * D            # output projection
                                     + 2 * D * mlp_dim))    # MLP matmuls
    transcendentals = int(depth * B * N * (heads * N + mlp_dim + heads + 3))
    w_bytes = int(depth * (3 * D * inner + inner * D + 2 * D * mlp_dim) * 2)
    bytes_accessed = int(2 * B * N * D * 4 + B * w_bytes)

    return pl.pallas_call(
        kernel,
        out_shape=jax.ShapeDtypeStruct((B, N, D), x.dtype),
        grid=(B, depth),
        in_specs=[
            act,                                             # x
            layer_vec(D), layer_vec(D),                      # attn LN gamma/beta
            layer_mat(D, 3 * inner),                         # fused w_qkv
            layer_mat(inner, D),                             # w_out
            layer_vec(D),                                    # b_out
            layer_vec(D), layer_vec(D),                      # ff LN gamma/beta
            layer_mat(D, mlp_dim), layer_vec(mlp_dim),       # w1, b1
            layer_mat(mlp_dim, D), layer_vec(D),             # w2, b2
            const_vec(D), const_vec(D),                      # final LN gamma/beta
        ],
        out_specs=act,
        scratch_shapes=[pltpu.VMEM((N, D), jnp.float32)],    # residual stream
        compiler_params=pltpu.CompilerParams(
            dimension_semantics=("parallel", "arbitrary"),
            vmem_limit_bytes=_vmem_limit_bytes()),
        cost_estimate=pl.CostEstimate(flops=flops,
                                      transcendentals=transcendentals,
                                      bytes_accessed=bytes_accessed),
    )(x,
      kp["ln1_g"], kp["ln1_b"], kp["wqkv"], kp["wo"], kp["bo"],
      kp["ln2_g"], kp["ln2_b"], kp["w1"], kp["b1"], kp["w2"], kp["b2"],
      kp["norm_g"], kp["norm_b"])


# ----------------------------------------------------------------------------
# Pure-JAX reference (mirrors the kernel's bf16-matmul / f32-accumulate policy)
# ----------------------------------------------------------------------------
def reference_forward(x, params, *, heads, dim_head, mlp_dim):
    inner = heads * dim_head
    for layer in params["layers"]:
        a, f = layer["attn"], layer["ff"]
        B, N, _ = x.shape

        xn = _layernorm(x, a["ln_g"][0], a["ln_b"][0])
        qkv = jnp.einsum('bnd,de->bne', _bf(xn), _bf(a["w_qkv"]),
                         preferred_element_type=jnp.float32)
        q, k, v = (qkv[..., :inner], qkv[..., inner:2 * inner], qkv[..., 2 * inner:])
        rs = lambda t: t.reshape(B, N, heads, dim_head).transpose(0, 2, 1, 3)
        q, k, v = rs(q), rs(k), rs(v)
        q = q * (dim_head ** -0.5)
        dots = jnp.einsum('bhnd,bhmd->bhnm', _bf(q), _bf(k),
                          preferred_element_type=jnp.float32)
        attn = jax.nn.softmax(dots, axis=-1)
        out = jnp.einsum('bhnm,bhmd->bhnd', _bf(attn), _bf(v),
                         preferred_element_type=jnp.float32)
        out = out.transpose(0, 2, 1, 3).reshape(B, N, inner)
        x = jnp.einsum('bni,id->bnd', _bf(out), _bf(a["w_out"]),
                       preferred_element_type=jnp.float32) + a["b_out"][0] + x

        xn = _layernorm(x, f["ln_g"][0], f["ln_b"][0])
        h = jnp.einsum('bnd,dm->bnm', _bf(xn), _bf(f["w1"]),
                       preferred_element_type=jnp.float32) + f["b1"][0]
        h = _gelu_exact(h)
        x = jnp.einsum('bnm,md->bnd', _bf(h), _bf(f["w2"]),
                       preferred_element_type=jnp.float32) + f["b2"][0] + x
    return _layernorm(x, params["norm_g"][0], params["norm_b"][0])


# ----------------------------------------------------------------------------
# Parameters
# ----------------------------------------------------------------------------
def init_params(key, *, dim, depth, heads, dim_head, mlp_dim):
    inner = heads * dim_head
    layers = []
    for _ in range(depth):
        key, k1, k2, k3 = jax.random.split(key, 4)
        attn = {
            "ln_g": jnp.ones((1, dim), jnp.float32),
            "ln_b": jnp.zeros((1, dim), jnp.float32),
            "w_qkv": 0.05 * jax.random.normal(k1, (dim, 3 * inner), jnp.float32),
            "w_out": 0.05 * jax.random.normal(k2, (inner, dim), jnp.float32),
            "b_out": 0.05 * jax.random.normal(k3, (1, dim), jnp.float32),
        }
        key, k5, k6, k7, k8 = jax.random.split(key, 5)
        ff = {
            "ln_g": jnp.ones((1, dim), jnp.float32),
            "ln_b": jnp.zeros((1, dim), jnp.float32),
            "w1": 0.05 * jax.random.normal(k5, (dim, mlp_dim), jnp.float32),
            "b1": 0.05 * jax.random.normal(k6, (1, mlp_dim), jnp.float32),
            "w2": 0.05 * jax.random.normal(k7, (mlp_dim, dim), jnp.float32),
            "b2": 0.05 * jax.random.normal(k8, (1, dim), jnp.float32),
        }
        layers.append({"attn": attn, "ff": ff})
    return {
        "layers": layers,
        "norm_g": jnp.ones((1, dim), jnp.float32),
        "norm_b": jnp.zeros((1, dim), jnp.float32),
    }


def prepare_kernel_params(params):
    """Stack per-layer params along a leading depth axis for the fused kernel.

    Matmul weights are stored bf16; LayerNorm params and biases stay f32.
    Vectors get a unit middle axis so every block's last two dims equal the
    full array dims (satisfies the (8,128) block-shape rule at any size).
    """
    L = params["layers"]
    st = lambda f: jnp.stack([f(layer) for layer in L], axis=0)
    return {
        "ln1_g": st(lambda l: l["attn"]["ln_g"]),                       # (depth,1,D)
        "ln1_b": st(lambda l: l["attn"]["ln_b"]),
        "wqkv": st(lambda l: l["attn"]["w_qkv"]).astype(jnp.bfloat16),  # (depth,D,3*inner)
        "wo":   st(lambda l: l["attn"]["w_out"]).astype(jnp.bfloat16),  # (depth,inner,D)
        "bo":   st(lambda l: l["attn"]["b_out"]),                       # (depth,1,D)
        "ln2_g": st(lambda l: l["ff"]["ln_g"]),
        "ln2_b": st(lambda l: l["ff"]["ln_b"]),
        "w1": st(lambda l: l["ff"]["w1"]).astype(jnp.bfloat16),         # (depth,D,mlp)
        "b1": st(lambda l: l["ff"]["b1"]),                              # (depth,1,mlp)
        "w2": st(lambda l: l["ff"]["w2"]).astype(jnp.bfloat16),         # (depth,mlp,D)
        "b2": st(lambda l: l["ff"]["b2"]),                              # (depth,1,D)
        "norm_g": params["norm_g"][None],                               # (1,1,D)
        "norm_b": params["norm_b"][None],
    }


if __name__ == "__main__":
    # Small shapes consistent with Transformer(dim, depth, heads, dim_head, mlp_dim)
    B, N = 2, 8
    dim, depth, heads, dim_head, mlp_dim = 32, 2, 4, 8, 64

    key = jax.random.PRNGKey(0)
    key, xkey = jax.random.split(key)
    x = jax.random.normal(xkey, (B, N, dim), jnp.float32)   # [batch, seq, dim]

    params = init_params(key, dim=dim, depth=depth, heads=heads,
                         dim_head=dim_head, mlp_dim=mlp_dim)
    kparams = prepare_kernel_params(params)

    fwd = jax.jit(functools.partial(transformer_forward, heads=heads,
                                    dim_head=dim_head, mlp_dim=mlp_dim))
    out = jax.block_until_ready(fwd(x, kparams))

    ref = reference_forward(x, params, heads=heads, dim_head=dim_head,
                            mlp_dim=mlp_dim)
    assert out.shape == (B, N, dim)
    err = float(jnp.max(jnp.abs(out - ref)))
    # bf16 matmul operands + approx softmax reciprocal => slightly loosened tol.
    assert jnp.allclose(out, ref, atol=2.5e-2, rtol=2.5e-2), f"max abs diff {err}"

    print("KERNEL_OK")
</pallas_src>

<mosaic_0001>
module attributes {stable_mosaic.version = 11 : i64} {
  func.func @transformer_kernel(%arg0: i32, %arg1: i32, %arg2: memref<1x8x32xf32, #tpu.memory_space<vmem>>, %arg3: memref<1x1x32xf32, #tpu.memory_space<vmem>>, %arg4: memref<1x1x32xf32, #tpu.memory_space<vmem>>, %arg5: memref<1x32x96xbf16, #tpu.memory_space<vmem>>, %arg6: memref<1x32x32xbf16, #tpu.memory_space<vmem>>, %arg7: memref<1x1x32xf32, #tpu.memory_space<vmem>>, %arg8: memref<1x1x32xf32, #tpu.memory_space<vmem>>, %arg9: memref<1x1x32xf32, #tpu.memory_space<vmem>>, %arg10: memref<1x32x64xbf16, #tpu.memory_space<vmem>>, %arg11: memref<1x1x64xf32, #tpu.memory_space<vmem>>, %arg12: memref<1x64x32xbf16, #tpu.memory_space<vmem>>, %arg13: memref<1x1x32xf32, #tpu.memory_space<vmem>>, %arg14: memref<1x1x32xf32, #tpu.memory_space<vmem>>, %arg15: memref<1x1x32xf32, #tpu.memory_space<vmem>>, %arg16: memref<1x8x32xf32, #tpu.memory_space<vmem>>, %arg17: memref<8x32xf32, #tpu.memory_space<vmem>>) attributes {dimension_semantics = [#tpu.dimension_semantics<parallel>, #tpu.dimension_semantics<arbitrary>], iteration_bounds = array<i64: 2, 2>, scalar_prefetch = 0 : i64, scratch_operands = 1 : i64, tpu.core_type = #tpu.core_type<tc>, window_params = [{transform_indices = @transform_0, window_bounds = array<i64: 1, 8, 32>}, {transform_indices = @transform_1, window_bounds = array<i64: 1, 1, 32>}, {transform_indices = @transform_2, window_bounds = array<i64: 1, 1, 32>}, {transform_indices = @transform_3, window_bounds = array<i64: 1, 32, 96>}, {transform_indices = @transform_4, window_bounds = array<i64: 1, 32, 32>}, {transform_indices = @transform_5, window_bounds = array<i64: 1, 1, 32>}, {transform_indices = @transform_6, window_bounds = array<i64: 1, 1, 32>}, {transform_indices = @transform_7, window_bounds = array<i64: 1, 1, 32>}, {transform_indices = @transform_8, window_bounds = array<i64: 1, 32, 64>}, {transform_indices = @transform_9, window_bounds = array<i64: 1, 1, 64>}, {transform_indices = @transform_10, window_bounds = array<i64: 1, 64, 32>}, {transform_indices = @transform_11, window_bounds = array<i64: 1, 1, 32>}, {pipeline_mode = #tpu.pipeline_mode<synchronous>, transform_indices = @transform_12, window_bounds = array<i64: 1, 1, 32>}, {pipeline_mode = #tpu.pipeline_mode<synchronous>, transform_indices = @transform_13, window_bounds = array<i64: 1, 1, 32>}, {transform_indices = @transform_14, window_bounds = array<i64: 1, 8, 32>}]} {
    %c0_i32 = arith.constant 0 : i32
    %0 = arith.cmpi eq, %arg1, %c0_i32 : i32
    %1 = arith.extui %0 : i1 to i32
    %c0_i32_0 = arith.constant 0 : i32
    %2 = arith.cmpi ne, %1, %c0_i32_0 : i32
    scf.if %2 {
      %c0_74 = arith.constant 0 : index
      %c0_75 = arith.constant 0 : index
      %c0_76 = arith.constant 0 : index
      %183 = vector.load %arg2[%c0_74, %c0_75, %c0_76] : memref<1x8x32xf32, #tpu.memory_space<vmem>>, vector<1x8x32xf32>
      %184 = vector.shape_cast %183 : vector<1x8x32xf32> to vector<8x32xf32>
      %c0_77 = arith.constant 0 : index
      %c0_78 = arith.constant 0 : index
      %185 = vector.load %arg17[%c0_77, %c0_78] : memref<8x32xf32, #tpu.memory_space<vmem>>, vector<8x32xf32>
      tpu.vector_store %arg17[%c0_77, %c0_78], %184 {strides = array<i32>} : memref<8x32xf32, #tpu.memory_space<vmem>>, vector<8x32xf32>,
    } else {
    }
    %c0 = arith.constant 0 : index
    %c0_1 = arith.constant 0 : index
    %3 = vector.load %arg17[%c0, %c0_1] : memref<8x32xf32, #tpu.memory_space<vmem>>, vector<8x32xf32>
    %c0_2 = arith.constant 0 : index
    %c0_3 = arith.constant 0 : index
    %c0_4 = arith.constant 0 : index
    %4 = vector.load %arg3[%c0_2, %c0_3, %c0_4] : memref<1x1x32xf32, #tpu.memory_space<vmem>>, vector<1x1x32xf32>
    %5 = vector.shape_cast %4 : vector<1x1x32xf32> to vector<1x32xf32>
    %c0_5 = arith.constant 0 : index
    %c0_6 = arith.constant 0 : index
    %c0_7 = arith.constant 0 : index
    %6 = vector.load %arg4[%c0_5, %c0_6, %c0_7] : memref<1x1x32xf32, #tpu.memory_space<vmem>>, vector<1x1x32xf32>
    %7 = vector.shape_cast %6 : vector<1x1x32xf32> to vector<1x32xf32>
    %cst = arith.constant dense<0.000000e+00> : vector<8xf32>
    %8 = vector.multi_reduction <add>, %3, %cst [1] : vector<8x32xf32> to vector<8xf32>
    %9 = vector.shape_cast %8 : vector<8xf32> to vector<8x1xf32>
    %cst_8 = arith.constant 3.200000e+01 : f32
    %10 = vector.broadcast %cst_8 : f32 to vector<8x1xf32>
    %11 = arith.divf %9, %10 : vector<8x1xf32>
    %12 = vector.broadcast %11 : vector<8x1xf32> to vector<8x32xf32>
    %13 = arith.subf %3, %12 : vector<8x32xf32>
    %14 = arith.mulf %13, %13 : vector<8x32xf32>
    %cst_9 = arith.constant dense<0.000000e+00> : vector<8xf32>
    %15 = vector.multi_reduction <add>, %14, %cst_9 [1] : vector<8x32xf32> to vector<8xf32>
    %16 = vector.shape_cast %15 : vector<8xf32> to vector<8x1xf32>
    %cst_10 = arith.constant 3.200000e+01 : f32
    %17 = vector.broadcast %cst_10 : f32 to vector<8x1xf32>
    %18 = arith.divf %16, %17 : vector<8x1xf32>
    %19 = vector.broadcast %11 : vector<8x1xf32> to vector<8x32xf32>
    %20 = arith.subf %3, %19 : vector<8x32xf32>
    %cst_11 = arith.constant 9.99999974E-6 : f32
    %21 = vector.broadcast %cst_11 : f32 to vector<8x1xf32>
    %22 = arith.addf %18, %21 : vector<8x1xf32>
    %23 = math.rsqrt %22 : vector<8x1xf32>
    %24 = vector.broadcast %23 : vector<8x1xf32> to vector<8x32xf32>
    %25 = arith.mulf %20, %24 : vector<8x32xf32>
    %26 = vector.broadcast %5 : vector<1x32xf32> to vector<8x32xf32>
    %27 = arith.mulf %25, %26 : vector<8x32xf32>
    %28 = vector.broadcast %7 : vector<1x32xf32> to vector<8x32xf32>
    %29 = arith.addf %27, %28 : vector<8x32xf32>
    %30 = arith.truncf %29 : vector<8x32xf32> to vector<8x32xbf16>
    %c0_12 = arith.constant 0 : index
    %c0_13 = arith.constant 0 : index
    %c0_14 = arith.constant 0 : index
    %31 = vector.load %arg5[%c0_12, %c0_13, %c0_14] : memref<1x32x96xbf16, #tpu.memory_space<vmem>>, vector<1x32x96xbf16>
    %32 = vector.shape_cast %31 : vector<1x32x96xbf16> to vector<32x96xbf16>
    %cst_15 = arith.constant dense<0.000000e+00> : vector<8x96xf32>
    %33 = tpu.matmul %30, %32, %cst_15 {dimension_numbers = #tpu.dot_dimension_numbers<[1], [0], [0], [1], [0, 0, 1, 1], [], []>} : vector<8x32xbf16>, vector<32x96xbf16>, vector<8x96xf32> -> vector<8x96xf32>
    %34 = vector.extract_strided_slice %33 {offsets = [0, 0], sizes = [8, 8], strides = [1, 1]} : vector<8x96xf32> to vector<8x8xf32>
    %cst_16 = arith.constant 0.353553385 : f32
    %35 = vector.broadcast %cst_16 : f32 to vector<8x8xf32>
    %36 = arith.mulf %34, %35 : vector<8x8xf32>
    %37 = arith.truncf %36 : vector<8x8xf32> to vector<8x8xbf16>
    %38 = vector.extract_strided_slice %33 {offsets = [0, 32], sizes = [8, 8], strides = [1, 1]} : vector<8x96xf32> to vector<8x8xf32>
    %39 = arith.truncf %38 : vector<8x8xf32> to vector<8x8xbf16>
    %40 = vector.extract_strided_slice %33 {offsets = [0, 64], sizes = [8, 8], strides = [1, 1]} : vector<8x96xf32> to vector<8x8xf32>
    %41 = arith.truncf %40 : vector<8x8xf32> to vector<8x8xbf16>
    "tpu.trace_start"() <{level = 10 : i32, message = "nd,md->nm"}> : () -> ()
    %cst_17 = arith.constant dense<0.000000e+00> : vector<8x8xf32>
    %42 = tpu.matmul %37, %39, %cst_17 {dimension_numbers = #tpu.dot_dimension_numbers<[1], [1], [0], [0], [0, 0, 1, 0], [], []>} : vector<8x8xbf16>, vector<8x8xbf16>, vector<8x8xf32> -> vector<8x8xf32>
    "tpu.trace_stop"() : () -> ()
    %cst_18 = arith.constant dense<0xFF800000> : vector<8xf32>
    %43 = vector.multi_reduction <maximumf>, %42, %cst_18 [1] : vector<8x8xf32> to vector<8xf32>
    %44 = vector.shape_cast %43 : vector<8xf32> to vector<8x1xf32>
    %45 = vector.broadcast %44 : vector<8x1xf32> to vector<8x8xf32>
    %46 = arith.subf %42, %45 : vector<8x8xf32>
    %47 = math.exp %46 : vector<8x8xf32>
    %cst_19 = arith.constant dense<0.000000e+00> : vector<8xf32>
    %48 = vector.multi_reduction <add>, %47, %cst_19 [1] : vector<8x8xf32> to vector<8xf32>
    %49 = vector.shape_cast %48 : vector<8xf32> to vector<8x1xf32>
    %50 = tpu.reciprocal %49 {approx = true} : vector<8x1xf32> -> vector<8x1xf32>
    %51 = vector.broadcast %50 : vector<8x1xf32> to vector<8x8xf32>
    %52 = arith.mulf %47, %51 : vector<8x8xf32>
    %53 = arith.truncf %52 : vector<8x8xf32> to vector<8x8xbf16>
    %cst_20 = arith.constant dense<0.000000e+00> : vector<8x8xf32>
    %54 = tpu.matmul %53, %41, %cst_20 {dimension_numbers = #tpu.dot_dimension_numbers<[1], [0], [0], [1], [0, 0, 1, 1], [], []>} : vector<8x8xbf16>, vector<8x8xbf16>, vector<8x8xf32> -> vector<8x8xf32>
    %55 = vector.extract_strided_slice %33 {offsets = [0, 8], sizes = [8, 8], strides = [1, 1]} : vector<8x96xf32> to vector<8x8xf32>
    %cst_21 = arith.constant 0.353553385 : f32
    %56 = vector.broadcast %cst_21 : f32 to vector<8x8xf32>
    %57 = arith.mulf %55, %56 : vector<8x8xf32>
    %58 = arith.truncf %57 : vector<8x8xf32> to vector<8x8xbf16>
    %59 = vector.extract_strided_slice %33 {offsets = [0, 40], sizes = [8, 8], strides = [1, 1]} : vector<8x96xf32> to vector<8x8xf32>
    %60 = arith.truncf %59 : vector<8x8xf32> to vector<8x8xbf16>
    %61 = vector.extract_strided_slice %33 {offsets = [0, 72], sizes = [8, 8], strides = [1, 1]} : vector<8x96xf32> to vector<8x8xf32>
    %62 = arith.truncf %61 : vector<8x8xf32> to vector<8x8xbf16>
    "tpu.trace_start"() <{level = 10 : i32, message = "nd,md->nm"}> : () -> ()
    %cst_22 = arith.constant dense<0.000000e+00> : vector<8x8xf32>
    %63 = tpu.matmul %58, %60, %cst_22 {dimension_numbers = #tpu.dot_dimension_numbers<[1], [1], [0], [0], [0, 0, 1, 0], [], []>} : vector<8x8xbf16>, vector<8x8xbf16>, vector<8x8xf32> -> vector<8x8xf32>
    "tpu.trace_stop"() : () -> ()
    %cst_23 = arith.constant dense<0xFF800000> : vector<8xf32>
    %64 = vector.multi_reduction <maximumf>, %63, %cst_23 [1] : vector<8x8xf32> to vector<8xf32>
    %65 = vector.shape_cast %64 : vector<8xf32> to vector<8x1xf32>
    %66 = vector.broadcast %65 : vector<8x1xf32> to vector<8x8xf32>
    %67 = arith.subf %63, %66 : vector<8x8xf32>
    %68 = math.exp %67 : vector<8x8xf32>
    %cst_24 = arith.constant dense<0.000000e+00> : vector<8xf32>
    %69 = vector.multi_reduction <add>, %68, %cst_24 [1] : vector<8x8xf32> to vector<8xf32>
    %70 = vector.shape_cast %69 : vector<8xf32> to vector<8x1xf32>
    %71 = tpu.reciprocal %70 {approx = true} : vector<8x1xf32> -> vector<8x1xf32>
    %72 = vector.broadcast %71 : vector<8x1xf32> to vector<8x8xf32>
    %73 = arith.mulf %68, %72 : vector<8x8xf32>
    %74 = arith.truncf %73 : vector<8x8xf32> to vector<8x8xbf16>
    %cst_25 = arith.constant dense<0.000000e+00> : vector<8x8xf32>
    %75 = tpu.matmul %74, %62, %cst_25 {dimension_numbers = #tpu.dot_dimension_numbers<[1], [0], [0], [1], [0, 0, 1, 1], [], []>} : vector<8x8xbf16>, vector<8x8xbf16>, vector<8x8xf32> -> vector<8x8xf32>
    %76 = vector.extract_strided_slice %33 {offsets = [0, 16], sizes = [8, 8], strides = [1, 1]} : vector<8x96xf32> to vector<8x8xf32>
    %cst_26 = arith.constant 0.353553385 : f32
    %77 = vector.broadcast %cst_26 : f32 to vector<8x8xf32>
    %78 = arith.mulf %76, %77 : vector<8x8xf32>
    %79 = arith.truncf %78 : vector<8x8xf32> to vector<8x8xbf16>
    %80 = vector.extract_strided_slice %33 {offsets = [0, 48], sizes = [8, 8], strides = [1, 1]} : vector<8x96xf32> to vector<8x8xf32>
    %81 = arith.truncf %80 : vector<8x8xf32> to vector<8x8xbf16>
    %82 = vector.extract_strided_slice %33 {offsets = [0, 80], sizes = [8, 8], strides = [1, 1]} : vector<8x96xf32> to vector<8x8xf32>
    %83 = arith.truncf %82 : vector<8x8xf32> to vector<8x8xbf16>
    "tpu.trace_start"() <{level = 10 : i32, message = "nd,md->nm"}> : () -> ()
    %cst_27 = arith.constant dense<0.000000e+00> : vector<8x8xf32>
    %84 = tpu.matmul %79, %81, %cst_27 {dimension_numbers = #tpu.dot_dimension_numbers<[1], [1], [0], [0], [0, 0, 1, 0], [], []>} : vector<8x8xbf16>, vector<8x8xbf16>, vector<8x8xf32> -> vector<8x8xf32>
    "tpu.trace_stop"() : () -> ()
    %cst_28 = arith.constant dense<0xFF800000> : vector<8xf32>
    %85 = vector.multi_reduction <maximumf>, %84, %cst_28 [1] : vector<8x8xf32> to vector<8xf32>
    %86 = vector.shape_cast %85 : vector<8xf32> to vector<8x1xf32>
    %87 = vector.broadcast %86 : vector<8x1xf32> to vector<8x8xf32>
    %88 = arith.subf %84, %87 : vector<8x8xf32>
    %89 = math.exp %88 : vector<8x8xf32>
    %cst_29 = arith.constant dense<0.000000e+00> : vector<8xf32>
    %90 = vector.multi_reduction <add>, %89, %cst_29 [1] : vector<8x8xf32> to vector<8xf32>
    %91 = vector.shape_cast %90 : vector<8xf32> to vector<8x1xf32>
    %92 = tpu.reciprocal %91 {approx = true} : vector<8x1xf32> -> vector<8x1xf32>
    %93 = vector.broadcast %92 : vector<8x1xf32> to vector<8x8xf32>
    %94 = arith.mulf %89, %93 : vector<8x8xf32>
    %95 = arith.truncf %94 : vector<8x8xf32> to vector<8x8xbf16>
    %cst_30 = arith.constant dense<0.000000e+00> : vector<8x8xf32>
    %96 = tpu.matmul %95, %83, %cst_30 {dimension_numbers = #tpu.dot_dimension_numbers<[1], [0], [0], [1], [0, 0, 1, 1], [], []>} : vector<8x8xbf16>, vector<8x8xbf16>, vector<8x8xf32> -> vector<8x8xf32>
    %97 = vector.extract_strided_slice %33 {offsets = [0, 24], sizes = [8, 8], strides = [1, 1]} : vector<8x96xf32> to vector<8x8xf32>
    %cst_31 = arith.constant 0.353553385 : f32
    %98 = vector.broadcast %cst_31 : f32 to vector<8x8xf32>
    %99 = arith.mulf %97, %98 : vector<8x8xf32>
    %100 = arith.truncf %99 : vector<8x8xf32> to vector<8x8xbf16>
    %101 = vector.extract_strided_slice %33 {offsets = [0, 56], sizes = [8, 8], strides = [1, 1]} : vector<8x96xf32> to vector<8x8xf32>
    %102 = arith.truncf %101 : vector<8x8xf32> to vector<8x8xbf16>
    %103 = vector.extract_strided_slice %33 {offsets = [0, 88], sizes = [8, 8], strides = [1, 1]} : vector<8x96xf32> to vector<8x8xf32>
    %104 = arith.truncf %103 : vector<8x8xf32> to vector<8x8xbf16>
    "tpu.trace_start"() <{level = 10 : i32, message = "nd,md->nm"}> : () -> ()
    %cst_32 = arith.constant dense<0.000000e+00> : vector<8x8xf32>
    %105 = tpu.matmul %100, %102, %cst_32 {dimension_numbers = #tpu.dot_dimension_numbers<[1], [1], [0], [0], [0, 0, 1, 0], [], []>} : vector<8x8xbf16>, vector<8x8xbf16>, vector<8x8xf32> -> vector<8x8xf32>
    "tpu.trace_stop"() : () -> ()
    %cst_33 = arith.constant dense<0xFF800000> : vector<8xf32>
    %106 = vector.multi_reduction <maximumf>, %105, %cst_33 [1] : vector<8x8xf32> to vector<8xf32>
    %107 = vector.shape_cast %106 : vector<8xf32> to vector<8x1xf32>
    %108 = vector.broadcast %107 : vector<8x1xf32> to vector<8x8xf32>
    %109 = arith.subf %105, %108 : vector<8x8xf32>
    %110 = math.exp %109 : vector<8x8xf32>
    %cst_34 = arith.constant dense<0.000000e+00> : vector<8xf32>
    %111 = vector.multi_reduction <add>, %110, %cst_34 [1] : vector<8x8xf32> to vector<8xf32>
    %112 = vector.shape_cast %111 : vector<8xf32> to vector<8x1xf32>
    %113 = tpu.reciprocal %112 {approx = true} : vector<8x1xf32> -> vector<8x1xf32>
    %114 = vector.broadcast %113 : vector<8x1xf32> to vector<8x8xf32>
    %115 = arith.mulf %110, %114 : vector<8x8xf32>
    %116 = arith.truncf %115 : vector<8x8xf32> to vector<8x8xbf16>
    %cst_35 = arith.constant dense<0.000000e+00> : vector<8x8xf32>
    %117 = tpu.matmul %116, %104, %cst_35 {dimension_numbers = #tpu.dot_dimension_numbers<[1], [0], [0], [1], [0, 0, 1, 1], [], []>} : vector<8x8xbf16>, vector<8x8xbf16>, vector<8x8xf32> -> vector<8x8xf32>
    %118 = tpu.concatenate %54, %75, %96, %117 in 1 : vector<8x8xf32>, vector<8x8xf32>, vector<8x8xf32>, vector<8x8xf32> -> vector<8x32xf32>
    %119 = arith.truncf %118 : vector<8x32xf32> to vector<8x32xbf16>
    %c0_36 = arith.constant 0 : index
    %c0_37 = arith.constant 0 : index
    %c0_38 = arith.constant 0 : index
    %120 = vector.load %arg6[%c0_36, %c0_37, %c0_38] : memref<1x32x32xbf16, #tpu.memory_space<vmem>>, vector<1x32x32xbf16>
    %121 = vector.shape_cast %120 : vector<1x32x32xbf16> to vector<32x32xbf16>
    %cst_39 = arith.constant dense<0.000000e+00> : vector<8x32xf32>
    %122 = tpu.matmul %119, %121, %cst_39 {dimension_numbers = #tpu.dot_dimension_numbers<[1], [0], [0], [1], [0, 0, 1, 1], [], []>} : vector<8x32xbf16>, vector<32x32xbf16>, vector<8x32xf32> -> vector<8x32xf32>
    %c0_40 = arith.constant 0 : index
    %c0_41 = arith.constant 0 : index
    %c0_42 = arith.constant 0 : index
    %123 = vector.load %arg7[%c0_40, %c0_41, %c0_42] : memref<1x1x32xf32, #tpu.memory_space<vmem>>, vector<1x1x32xf32>
    %124 = vector.shape_cast %123 : vector<1x1x32xf32> to vector<1x32xf32>
    %125 = vector.broadcast %124 : vector<1x32xf32> to vector<8x32xf32>
    %126 = arith.addf %122, %125 : vector<8x32xf32>
    %127 = arith.addf %3, %126 : vector<8x32xf32>
    %c0_43 = arith.constant 0 : index
    %c0_44 = arith.constant 0 : index
    %c0_45 = arith.constant 0 : index
    %128 = vector.load %arg8[%c0_43, %c0_44, %c0_45] : memref<1x1x32xf32, #tpu.memory_space<vmem>>, vector<1x1x32xf32>
    %129 = vector.shape_cast %128 : vector<1x1x32xf32> to vector<1x32xf32>
    %c0_46 = arith.constant 0 : index
    %c0_47 = arith.constant 0 : index
    %c0_48 = arith.constant 0 : index
    %130 = vector.load %arg9[%c0_46, %c0_47, %c0_48] : memref<1x1x32xf32, #tpu.memory_space<vmem>>, vector<1x1x32xf32>
    %131 = vector.shape_cast %130 : vector<1x1x32xf32> to vector<1x32xf32>
    %cst_49 = arith.constant dense<0.000000e+00> : vector<8xf32>
    %132 = vector.multi_reduction <add>, %127, %cst_49 [1] : vector<8x32xf32> to vector<8xf32>
    %133 = vector.shape_cast %132 : vector<8xf32> to vector<8x1xf32>
    %cst_50 = arith.constant 3.200000e+01 : f32
    %134 = vector.broadcast %cst_50 : f32 to vector<8x1xf32>
    %135 = arith.divf %133, %134 : vector<8x1xf32>
    %136 = vector.broadcast %135 : vector<8x1xf32> to vector<8x32xf32>
    %137 = arith.subf %127, %136 : vector<8x32xf32>
    %138 = arith.mulf %137, %137 : vector<8x32xf32>
    %cst_51 = arith.constant dense<0.000000e+00> : vector<8xf32>
    %139 = vector.multi_reduction <add>, %138, %cst_51 [1] : vector<8x32xf32> to vector<8xf32>
    %140 = vector.shape_cast %139 : vector<8xf32> to vector<8x1xf32>
    %cst_52 = arith.constant 3.200000e+01 : f32
    %141 = vector.broadcast %cst_52 : f32 to vector<8x1xf32>
    %142 = arith.divf %140, %141 : vector<8x1xf32>
    %143 = vector.broadcast %135 : vector<8x1xf32> to vector<8x32xf32>
    %144 = arith.subf %127, %143 : vector<8x32xf32>
    %cst_53 = arith.constant 9.99999974E-6 : f32
    %145 = vector.broadcast %cst_53 : f32 to vector<8x1xf32>
    %146 = arith.addf %142, %145 : vector<8x1xf32>
    %147 = math.rsqrt %146 : vector<8x1xf32>
    %148 = vector.broadcast %147 : vector<8x1xf32> to vector<8x32xf32>
    %149 = arith.mulf %144, %148 : vector<8x32xf32>
    %150 = vector.broadcast %129 : vector<1x32xf32> to vector<8x32xf32>
    %151 = arith.mulf %149, %150 : vector<8x32xf32>
    %152 = vector.broadcast %131 : vector<1x32xf32> to vector<8x32xf32>
    %153 = arith.addf %151, %152 : vector<8x32xf32>
    %154 = arith.truncf %153 : vector<8x32xf32> to vector<8x32xbf16>
    %c0_54 = arith.constant 0 : index
    %c0_55 = arith.constant 0 : index
    %c0_56 = arith.constant 0 : index
    %155 = vector.load %arg10[%c0_54, %c0_55, %c0_56] : memref<1x32x64xbf16, #tpu.memory_space<vmem>>, vector<1x32x64xbf16>
    %156 = vector.shape_cast %155 : vector<1x32x64xbf16> to vector<32x64xbf16>
    %cst_57 = arith.constant dense<0.000000e+00> : vector<8x64xf32>
    %157 = tpu.matmul %154, %156, %cst_57 {dimension_numbers = #tpu.dot_dimension_numbers<[1], [0], [0], [1], [0, 0, 1, 1], [], []>} : vector<8x32xbf16>, vector<32x64xbf16>, vector<8x64xf32> -> vector<8x64xf32>
    %c0_58 = arith.constant 0 : index
    %c0_59 = arith.constant 0 : index
    %c0_60 = arith.constant 0 : index
    %158 = vector.load %arg11[%c0_58, %c0_59, %c0_60] : memref<1x1x64xf32, #tpu.memory_space<vmem>>, vector<1x1x64xf32>
    %159 = vector.shape_cast %158 : vector<1x1x64xf32> to vector<1x64xf32>
    %160 = vector.broadcast %159 : vector<1x64xf32> to vector<8x64xf32>
    %161 = arith.addf %157, %160 : vector<8x64xf32>
    %cst_61 = arith.constant 5.000000e-01 : f32
    %162 = vector.broadcast %cst_61 : f32 to vector<8x64xf32>
    %163 = arith.mulf %162, %161 : vector<8x64xf32>
    %cst_62 = arith.constant 1.41421354 : f32
    %164 = vector.broadcast %cst_62 : f32 to vector<8x64xf32>
    %165 = arith.divf %161, %164 : vector<8x64xf32>
    %166 = math.erf %165 : vector<8x64xf32>
    %cst_63 = arith.constant 1.000000e+00 : f32
    %167 = vector.broadcast %cst_63 : f32 to vector<8x64xf32>
    %168 = arith.addf %167, %166 : vector<8x64xf32>
    %169 = arith.mulf %163, %168 : vector<8x64xf32>
    %170 = arith.truncf %169 : vector<8x64xf32> to vector<8x64xbf16>
    %c0_64 = arith.constant 0 : index
    %c0_65 = arith.constant 0 : index
    %c0_66 = arith.constant 0 : index
    %171 = vector.load %arg12[%c0_64, %c0_65, %c0_66] : memref<1x64x32xbf16, #tpu.memory_space<vmem>>, vector<1x64x32xbf16>
    %172 = vector.shape_cast %171 : vector<1x64x32xbf16> to vector<64x32xbf16>
    %cst_67 = arith.constant dense<0.000000e+00> : vector<8x32xf32>
    %173 = tpu.matmul %170, %172, %cst_67 {dimension_numbers = #tpu.dot_dimension_numbers<[1], [0], [0], [1], [0, 0, 1, 1], [], []>} : vector<8x64xbf16>, vector<64x32xbf16>, vector<8x32xf32> -> vector<8x32xf32>
    %c0_68 = arith.constant 0 : index
    %c0_69 = arith.constant 0 : index
    %c0_70 = arith.constant 0 : index
    %174 = vector.load %arg13[%c0_68, %c0_69, %c0_70] : memref<1x1x32xf32, #tpu.memory_space<vmem>>, vector<1x1x32xf32>
    %175 = vector.shape_cast %174 : vector<1x1x32xf32> to vector<1x32xf32>
    %176 = vector.broadcast %175 : vector<1x32xf32> to vector<8x32xf32>
    %177 = arith.addf %173, %176 : vector<8x32xf32>
    %178 = arith.addf %127, %177 : vector<8x32xf32>
    %c0_71 = arith.constant 0 : index
    %c0_72 = arith.constant 0 : index
    %179 = vector.load %arg17[%c0_71, %c0_72] : memref<8x32xf32, #tpu.memory_space<vmem>>, vector<8x32xf32>
    tpu.vector_store %arg17[%c0_71, %c0_72], %178 {strides = array<i32>} : memref<8x32xf32, #tpu.memory_space<vmem>>, vector<8x32xf32>,
    %c1_i32 = arith.constant 1 : i32
    %180 = arith.cmpi eq, %arg1, %c1_i32 : i32
    %181 = arith.extui %180 : i1 to i32
    %c0_i32_73 = arith.constant 0 : i32
    %182 = arith.cmpi ne, %181, %c0_i32_73 : i32
    scf.if %182 {
      %c0_74 = arith.constant 0 : index
      %c0_75 = arith.constant 0 : index
      %c0_76 = arith.constant 0 : index
      %183 = vector.load %arg14[%c0_74, %c0_75, %c0_76] : memref<1x1x32xf32, #tpu.memory_space<vmem>>, vector<1x1x32xf32>
      %184 = vector.shape_cast %183 : vector<1x1x32xf32> to vector<1x32xf32>
      %c0_77 = arith.constant 0 : index
      %c0_78 = arith.constant 0 : index
      %c0_79 = arith.constant 0 : index
      %185 = vector.load %arg15[%c0_77, %c0_78, %c0_79] : memref<1x1x32xf32, #tpu.memory_space<vmem>>, vector<1x1x32xf32>
      %186 = vector.shape_cast %185 : vector<1x1x32xf32> to vector<1x32xf32>
      %cst_80 = arith.constant dense<0.000000e+00> : vector<8xf32>
      %187 = vector.multi_reduction <add>, %178, %cst_80 [1] : vector<8x32xf32> to vector<8xf32>
      %188 = vector.shape_cast %187 : vector<8xf32> to vector<8x1xf32>
      %cst_81 = arith.constant 3.200000e+01 : f32
      %189 = vector.broadcast %cst_81 : f32 to vector<8x1xf32>
      %190 = arith.divf %188, %189 : vector<8x1xf32>
      %191 = vector.broadcast %190 : vector<8x1xf32> to vector<8x32xf32>
      %192 = arith.subf %178, %191 : vector<8x32xf32>
      %193 = arith.mulf %192, %192 : vector<8x32xf32>
      %cst_82 = arith.constant dense<0.000000e+00> : vector<8xf32>
      %194 = vector.multi_reduction <add>, %193, %cst_82 [1] : vector<8x32xf32> to vector<8xf32>
      %195 = vector.shape_cast %194 : vector<8xf32> to vector<8x1xf32>
      %cst_83 = arith.constant 3.200000e+01 : f32
      %196 = vector.broadcast %cst_83 : f32 to vector<8x1xf32>
      %197 = arith.divf %195, %196 : vector<8x1xf32>
      %198 = vector.broadcast %190 : vector<8x1xf32> to vector<8x32xf32>
      %199 = arith.subf %178, %198 : vector<8x32xf32>
      %cst_84 = arith.constant 9.99999974E-6 : f32
      %200 = vector.broadcast %cst_84 : f32 to vector<8x1xf32>
      %201 = arith.addf %197, %200 : vector<8x1xf32>
      %202 = math.rsqrt %201 : vector<8x1xf32>
      %203 = vector.broadcast %202 : vector<8x1xf32> to vector<8x32xf32>
      %204 = arith.mulf %199, %203 : vector<8x32xf32>
      %205 = vector.broadcast %184 : vector<1x32xf32> to vector<8x32xf32>
      %206 = arith.mulf %204, %205 : vector<8x32xf32>
      %207 = vector.broadcast %186 : vector<1x32xf32> to vector<8x32xf32>
      %208 = arith.addf %206, %207 : vector<8x32xf32>
      %c0_85 = arith.constant 0 : index
      %c0_86 = arith.constant 0 : index
      %c0_87 = arith.constant 0 : index
      %209 = vector.load %arg16[%c0_85, %c0_86, %c0_87] : memref<1x8x32xf32, #tpu.memory_space<vmem>>, vector<1x8x32xf32>
      %210 = vector.shape_cast %209 : vector<1x8x32xf32> to vector<8x32xf32>
      %211 = vector.shape_cast %208 : vector<8x32xf32> to vector<1x8x32xf32>
      tpu.vector_store %arg16[%c0_85, %c0_86, %c0_87], %211 {strides = array<i32>} : memref<1x8x32xf32, #tpu.memory_space<vmem>>, vector<1x8x32xf32>,
    } else {
    }
    return
  }
  func.func @transform_0(%arg0: i32, %arg1: i32) -> (i32, i32, i32) {
    %c0_i32 = arith.constant 0 : i32
    %c0_i32_0 = arith.constant 0 : i32
    %c0_i32_1 = arith.constant 0 : i32
    return %arg0, %c0_i32, %c0_i32_0 : i32, i32, i32
  }
  func.func @transform_1(%arg0: i32, %arg1: i32) -> (i32, i32, i32) {
    %c0_i32 = arith.constant 0 : i32
    %c0_i32_0 = arith.constant 0 : i32
    %c0_i32_1 = arith.constant 0 : i32
    return %arg1, %c0_i32, %c0_i32_0 : i32, i32, i32
  }
  func.func @transform_2(%arg0: i32, %arg1: i32) -> (i32, i32, i32) {
    %c0_i32 = arith.constant 0 : i32
    %c0_i32_0 = arith.constant 0 : i32
    %c0_i32_1 = arith.constant 0 : i32
    return %arg1, %c0_i32, %c0_i32_0 : i32, i32, i32
  }
  func.func @transform_3(%arg0: i32, %arg1: i32) -> (i32, i32, i32) {
    %c0_i32 = arith.constant 0 : i32
    %c0_i32_0 = arith.constant 0 : i32
    %c0_i32_1 = arith.constant 0 : i32
    return %arg1, %c0_i32, %c0_i32_0 : i32, i32, i32
  }
  func.func @transform_4(%arg0: i32, %arg1: i32) -> (i32, i32, i32) {
    %c0_i32 = arith.constant 0 : i32
    %c0_i32_0 = arith.constant 0 : i32
    %c0_i32_1 = arith.constant 0 : i32
    return %arg1, %c0_i32, %c0_i32_0 : i32, i32, i32
  }
  func.func @transform_5(%arg0: i32, %arg1: i32) -> (i32, i32, i32) {
    %c0_i32 = arith.constant 0 : i32
    %c0_i32_0 = arith.constant 0 : i32
    %c0_i32_1 = arith.constant 0 : i32
    return %arg1, %c0_i32, %c0_i32_0 : i32, i32, i32
  }
  func.func @transform_6(%arg0: i32, %arg1: i32) -> (i32, i32, i32) {
    %c0_i32 = arith.constant 0 : i32
    %c0_i32_0 = arith.constant 0 : i32
    %c0_i32_1 = arith.constant 0 : i32
    return %arg1, %c0_i32, %c0_i32_0 : i32, i32, i32
  }
  func.func @transform_7(%arg0: i32, %arg1: i32) -> (i32, i32, i32) {
    %c0_i32 = arith.constant 0 : i32
    %c0_i32_0 = arith.constant 0 : i32
    %c0_i32_1 = arith.constant 0 : i32
    return %arg1, %c0_i32, %c0_i32_0 : i32, i32, i32
  }
  func.func @transform_8(%arg0: i32, %arg1: i32) -> (i32, i32, i32) {
    %c0_i32 = arith.constant 0 : i32
    %c0_i32_0 = arith.constant 0 : i32
    %c0_i32_1 = arith.constant 0 : i32
    return %arg1, %c0_i32, %c0_i32_0 : i32, i32, i32
  }
  func.func @transform_9(%arg0: i32, %arg1: i32) -> (i32, i32, i32) {
    %c0_i32 = arith.constant 0 : i32
    %c0_i32_0 = arith.constant 0 : i32
    %c0_i32_1 = arith.constant 0 : i32
    return %arg1, %c0_i32, %c0_i32_0 : i32, i32, i32
  }
  func.func @transform_10(%arg0: i32, %arg1: i32) -> (i32, i32, i32) {
    %c0_i32 = arith.constant 0 : i32
    %c0_i32_0 = arith.constant 0 : i32
    %c0_i32_1 = arith.constant 0 : i32
    return %arg1, %c0_i32, %c0_i32_0 : i32, i32, i32
  }
  func.func @transform_11(%arg0: i32, %arg1: i32) -> (i32, i32, i32) {
    %c0_i32 = arith.constant 0 : i32
    %c0_i32_0 = arith.constant 0 : i32
    %c0_i32_1 = arith.constant 0 : i32
    return %arg1, %c0_i32, %c0_i32_0 : i32, i32, i32
  }
  func.func @transform_12(%arg0: i32, %arg1: i32) -> (i32, i32, i32) {
    %c0_i32 = arith.constant 0 : i32
    %c0_i32_0 = arith.constant 0 : i32
    %c0_i32_1 = arith.constant 0 : i32
    %c0_i32_2 = arith.constant 0 : i32
    return %c0_i32, %c0_i32_0, %c0_i32_1 : i32, i32, i32
  }
  func.func @transform_13(%arg0: i32, %arg1: i32) -> (i32, i32, i32) {
    %c0_i32 = arith.constant 0 : i32
    %c0_i32_0 = arith.constant 0 : i32
    %c0_i32_1 = arith.constant 0 : i32
    %c0_i32_2 = arith.constant 0 : i32
    return %c0_i32, %c0_i32_0, %c0_i32_1 : i32, i32, i32
  }
  func.func @transform_14(%arg0: i32, %arg1: i32) -> (i32, i32, i32) {
    %c0_i32 = arith.constant 0 : i32
    %c0_i32_0 = arith.constant 0 : i32
    %c0_i32_1 = arith.constant 0 : i32
    return %arg0, %c0_i32, %c0_i32_0 : i32, i32, i32
  }
}

</mosaic_0001>

<llo_original>
// kernel: transformer_forward.1
$region0: #{transformer_forward.1}
  #allocation0 [shape = 'u32[]', space=smem, size = 0x4, offset = 0x4, fixed_abs, tag = 'smem constant byte address 0x4 - core index']
  #allocation1 [shape = 'u32[72,128]{1,0:T(1,128)}', space=vmem, size = 0x9000, scoped, tag = 'internal scratch']
  #allocation2 [shape = 'f32[8,32]{1,0:T(8,128)}', space=vmem, size = 0x1000, scoped, tag = 'scratch operand']
  %s0 = inlined_call_operand.hbm [shape: f32[2,8,32], index: 0, kind: input, shape index: {}]
  %s1 = inlined_call_operand.vmem [shape: f32[2,1,32], index: 1, kind: input, shape index: {}]
  %s2 = inlined_call_operand.hbm [shape: f32[2,1,32], index: 2, kind: input, shape index: {}]
  %s3 = inlined_call_operand.vmem [shape: bf16[2,32,96], index: 3, kind: input, shape index: {}]
  %s4 = inlined_call_operand.vmem [shape: bf16[2,32,32], index: 4, kind: input, shape index: {}]
  %s5 = inlined_call_operand.hbm [shape: f32[2,1,32], index: 5, kind: input, shape index: {}]
  %s6 = inlined_call_operand.vmem [shape: f32[2,1,32], index: 6, kind: input, shape index: {}]
  %s7 = inlined_call_operand.hbm [shape: f32[2,1,32], index: 7, kind: input, shape index: {}]
  %s8 = inlined_call_operand.vmem [shape: bf16[2,32,64], index: 8, kind: input, shape index: {}]
  %s9 = inlined_call_operand.hbm [shape: f32[2,1,64], index: 9, kind: input, shape index: {}]
  %s10 = inlined_call_operand.vmem [shape: bf16[2,64,32], index: 10, kind: input, shape index: {}]
  %s11 = inlined_call_operand.hbm [shape: f32[2,1,32], index: 11, kind: input, shape index: {}]
  %s12 = inlined_call_operand.vmem [shape: f32[1,1,32], index: 12, kind: input, shape index: {}]
  %s13 = inlined_call_operand.vmem [shape: f32[1,1,32], index: 13, kind: input, shape index: {}]
  %s14 = inlined_call_operand.hbm [shape: f32[2,8,32], index: 14, kind: output, shape index: {}]
  %s15 = sld [smem:[#allocation0]]
  $region121: #{transformer_forward.1} parent=0
    _
  %s17 = ssub.s32 1, %s15
  %s18 = scalar_select 0, %s17, %s15
  $region1: #{transformer_forward.1} parent=0
    #allocation3 [shape = 'u8[8192]{0}', space=vmem, size = 0x2000, scoped, tag = 'input window, operand 0']
    #allocation4 [shape = 's32[2]{0}', space=sflag, size = 0x8, scoped, tag = 'scoped memory for transformer_forward.1']
    #allocation5 [shape = 's32[2]{0}', space=sflag, size = 0x8, scoped, tag = 'scoped memory for transformer_forward.1']
    #allocation6 [shape = 'u8[1024]{0}', space=vmem, size = 0x400, scoped, tag = 'input window, operand 2']
    #allocation7 [shape = 's32[2]{0}', space=sflag, size = 0x8, scoped, tag = 'scoped memory for transformer_forward.1']
    #allocation8 [shape = 'u8[1024]{0}', space=vmem, size = 0x400, scoped, tag = 'input window, operand 5']
    #allocation9 [shape = 'u8[1024]{0}', space=vmem, size = 0x400, scoped, tag = 'input window, operand 7']
    #allocation10 [shape = 's32[2]{0}', space=sflag, size = 0x8, scoped, tag = 'scoped memory for transformer_forward.1']
    #allocation11 [shape = 'u8[1024]{0}', space=vmem, size = 0x400, scoped, tag = 'input window, operand 9']
    #allocation12 [shape = 'u8[1024]{0}', space=vmem, size = 0x400, scoped, tag = 'input window, operand 11']
    #allocation13 [shape = 's32[2]{0}', space=sflag, size = 0x8, scoped, tag = 'scoped memory for transformer_forward.1']
    #allocation14 [shape = 'u8[8192]{0}', space=vmem, size = 0x2000, scoped, tag = 'output window, operand 0']
    %19 = vsyncpa [#allocation4], 0
    %s20 = scalar_lea.sflag [#allocation4], 1
    %21 = vsyncpa %s20, 0
    %22 = vsyncpa [#allocation7], 0
    %s23 = scalar_lea.sflag [#allocation7], 1
    %24 = vsyncpa %s23, 0
    %25 = vsyncpa [#allocation10], 0
    %s26 = scalar_lea.sflag [#allocation10], 1
    %27 = vsyncpa %s26, 0
    %28 = vsyncpa [#allocation13], 0
    %s29 = scalar_lea.sflag [#allocation13], 1
    %30 = vsyncpa %s29, 0
    %31 = vsyncpa [#allocation5], 0
    %s32 = scalar_lea.sflag [#allocation5], 1
    %33 = vsyncpa %s32, 0
    loop: start=0, step=1, limit=6
    $region2: #{transformer_forward.1} parent=1 // loop_pre_header
      _
    $region3: #{transformer_forward.1} parent=1 // loop_header
      %s35 = sphi 0, %s39
      %p36 = scmp.ge.s32.totalorder %s35, 6
      %s42 = sphi 0, %s54
      %s43 = sphi 0, %s50
      %s44 = sphi 0, %s42
      %s45 = sphi 0, %s43
      %s46 = sphi 0, %s44
      %s47 = sphi 0, %s45
      %s57 = sphi 0, %s59
      %s60 = sphi 0, %s57
      %s61 = sphi 0, %s60
      %s77 = sphi 0, %s61
      %s83 = sphi 0, %s85
      %s86 = sphi 0, %s83
      %s87 = sphi 0, %s86
      %s103 = sphi 0, %s87
      %s109 = sphi 0, %s111
      %s112 = sphi 0, %s109
      %s113 = sphi 0, %s112
      %s129 = sphi 0, %s113
      %s135 = sphi 0, %s137
      %s138 = sphi 0, %s135
      %s139 = sphi 0, %s138
      %s155 = sphi 0, %s139
      %s161 = sphi 0, %s163
      %s164 = sphi 0, %s161
      %s165 = sphi 0, %s164
      %s181 = sphi 0, %s165
      %s187 = sphi 0, %s189
      %s190 = sphi 0, %s187
      %s191 = sphi 0, %s190
      %s207 = sphi 0, %s191
      %s213 = sphi 0, %s215
      %s216 = sphi 0, %s213
      %s217 = sphi 0, %s216
      %s233 = sphi 0, %s217
      %s239 = sphi 0, %s241
      %s242 = sphi 0, %s239
      %s243 = sphi 0, %s242
      %s259 = sphi 0, %s243
      %s265 = sphi 0, %s267
      %s268 = sphi 0, %s265
      %s269 = sphi 0, %s268
      %s285 = sphi 0, %s269
      %s291 = sphi 0, %s293
      %s294 = sphi 0, %s291
      %s295 = sphi 0, %s294
      %s311 = sphi 0, %s295
      %s317 = sphi 0, %s319
      %s320 = sphi 0, %s317
      %s321 = sphi 0, %s320
      %s337 = sphi 0, %s321
      %s343 = sphi 0, %s345
      %s346 = sphi 0, %s343
      %s347 = sphi 0, %s346
      %s363 = sphi 0, %s347
      %s367 = sphi 0, %s367
      %s369 = sphi 0, %s367
      %s370 = sphi 0, %s369
      %s384 = sphi 0, %s370
      %s388 = sphi 0, %s388
      %s390 = sphi 0, %s388
      %s391 = sphi 0, %s390
      %s405 = sphi 0, %s391
      %s411 = sphi 0, %s413
      %s414 = sphi 0, %s411
      %s415 = sphi 0, %s414
      %s431 = sphi 0, %s415
    $region4: #{transformer_forward.1} parent=1 // loop_header_branch
      %38 = sbr.rel (%p36) target = $region8
    $region5: #{transformer_forward.1} parent=1 // loop_body
      %s40 = ssub.s32 %s35, 1
      %s41 = ssub.s32 %s35, 2
      %s48 = sadd.s32 1, %s43
      %p49 = scmp.ge.s32.totalorder %s48, 2
      %s50 = scalar_select %p49, 0, %s48
      %s51 = sadd.s32 1, %s42
      %s52 = scalar_select %p49, %s51, %s42
      %p53 = scmp.ge.s32.totalorder %s52, 2
      %s54 = scalar_select %p53, 0, %s52
      %s55 = ssub.s32 %s42, %s54
      %p56 = scmp.eq.s32.totalorder %s55, 0
      %s58 = sadd.s32 %s57, 1
      %s59 = scalar_select %p56, %s57, %s58
      %p62 = pneg %p56
      %p63 = scmp.eq.s32.totalorder %s35, 3
      %p64 = por %p62, %p63
      %p65 = scmp.ne.s32.totalorder %s57, %s60
      %p66 = scmp.eq.s32.totalorder %s35, 0
      %p67 = por %p65, %p66
      %p68 = scmp.ne.s32.totalorder %s57, %s60
      %p69 = scmp.eq.s32.totalorder %s40, 3
      %p70 = por %p68, %p69
      %p71 = scmp.ne.s32.totalorder %s60, %s61
      %p72 = scmp.eq.s32.totalorder %s40, 0
      %p73 = por %p71, %p72
      %p74 = scmp.ne.s32.totalorder %s60, %s61
      %p75 = scmp.eq.s32.totalorder %s41, 3
      %p76 = por %p74, %p75
      %p78 = scmp.ne.s32.totalorder %s61, %s77
      %p79 = scmp.eq.s32.totalorder %s41, 0
      %p80 = por %p78, %p79
      %s81 = ssub.s32 %s43, %s50
      %p82 = scmp.eq.s32.totalorder %s81, 0
      %s84 = sadd.s32 %s83, 1
      %s85 = scalar_select %p82, %s83, %s84
      %p88 = pneg %p82
      %p89 = scmp.eq.s32.totalorder %s35, 3
      %p90 = por %p88, %p89
      %p91 = scmp.ne.s32.totalorder %s83, %s86
      %p92 = scmp.eq.s32.totalorder %s35, 0
      %p93 = por %p91, %p92
      %p94 = scmp.ne.s32.totalorder %s83, %s86
      %p95 = scmp.eq.s32.totalorder %s40, 3
      %p96 = por %p94, %p95
      %p97 = scmp.ne.s32.totalorder %s86, %s87
      %p98 = scmp.eq.s32.totalorder %s40, 0
      %p99 = por %p97, %p98
      %p100 = scmp.ne.s32.totalorder %s86, %s87
      %p101 = scmp.eq.s32.totalorder %s41, 3
      %p102 = por %p100, %p101
      %p104 = scmp.ne.s32.totalorder %s87, %s103
      %p105 = scmp.eq.s32.totalorder %s41, 0
      %p106 = por %p104, %p105
      %s107 = ssub.s32 %s43, %s50
      %p108 = scmp.eq.s32.totalorder %s107, 0
      %s110 = sadd.s32 %s109, 1
      %s111 = scalar_select %p108, %s109, %s110
      %p114 = pneg %p108
      %p115 = scmp.eq.s32.totalorder %s35, 3
      %p116 = por %p114, %p115
      %p117 = scmp.ne.s32.totalorder %s109, %s112
      %p118 = scmp.eq.s32.totalorder %s35, 0
      %p119 = por %p117, %p118
      %p120 = scmp.ne.s32.totalorder %s109, %s112
      %p121 = scmp.eq.s32.totalorder %s40, 3
      %p122 = por %p120, %p121
      %p123 = scmp.ne.s32.totalorder %s112, %s113
      %p124 = scmp.eq.s32.totalorder %s40, 0
      %p125 = por %p123, %p124
      %p126 = scmp.ne.s32.totalorder %s112, %s113
      %p127 = scmp.eq.s32.totalorder %s41, 3
      %p128 = por %p126, %p127
      %p130 = scmp.ne.s32.totalorder %s113, %s129
      %p131 = scmp.eq.s32.totalorder %s41, 0
      %p132 = por %p130, %p131
      %s133 = ssub.s32 %s43, %s50
      %p134 = scmp.eq.s32.totalorder %s133, 0
      %s136 = sadd.s32 %s135, 1
      %s137 = scalar_select %p134, %s135, %s136
      %p140 = pneg %p134
      %p141 = scmp.eq.s32.totalorder %s35, 3
      %p142 = por %p140, %p141
      %p143 = scmp.ne.s32.totalorder %s135, %s138
      %p144 = scmp.eq.s32.totalorder %s35, 0
      %p145 = por %p143, %p144
      %p146 = scmp.ne.s32.totalorder %s135, %s138
      %p147 = scmp.eq.s32.totalorder %s40, 3
      %p148 = por %p146, %p147
      %p149 = scmp.ne.s32.totalorder %s138, %s139
      %p150 = scmp.eq.s32.totalorder %s40, 0
      %p151 = por %p149, %p150
      %p152 = scmp.ne.s32.totalorder %s138, %s139
      %p153 = scmp.eq.s32.totalorder %s41, 3
      %p154 = por %p152, %p153
      %p156 = scmp.ne.s32.totalorder %s139, %s155
      %p157 = scmp.eq.s32.totalorder %s41, 0
      %p158 = por %p156, %p157
      %s159 = ssub.s32 %s43, %s50
      %p160 = scmp.eq.s32.totalorder %s159, 0
      %s162 = sadd.s32 %s161, 1
      %s163 = scalar_select %p160, %s161, %s162
      %p166 = pneg %p160
      %p167 = scmp.eq.s32.totalorder %s35, 3
      %p168 = por %p166, %p167
      %p169 = scmp.ne.s32.totalorder %s161, %s164
      %p170 = scmp.eq.s32.totalorder %s35, 0
      %p171 = por %p169, %p170
      %p172 = scmp.ne.s32.totalorder %s161, %s164
      %p173 = scmp.eq.s32.totalorder %s40, 3
      %p174 = por %p172, %p173
      %p175 = scmp.ne.s32.totalorder %s164, %s165
      %p176 = scmp.eq.s32.totalorder %s40, 0
      %p177 = por %p175, %p176
      %p178 = scmp.ne.s32.totalorder %s164, %s165
      %p179 = scmp.eq.s32.totalorder %s41, 3
      %p180 = por %p178, %p179
      %p182 = scmp.ne.s32.totalorder %s165, %s181
      %p183 = scmp.eq.s32.totalorder %s41, 0
      %p184 = por %p182, %p183
      %s185 = ssub.s32 %s43, %s50
      %p186 = scmp.eq.s32.totalorder %s185, 0
      %s188 = sadd.s32 %s187, 1
      %s189 = scalar_select %p186, %s187, %s188
      %p192 = pneg %p186
      %p193 = scmp.eq.s32.totalorder %s35, 3
      %p194 = por %p192, %p193
      %p195 = scmp.ne.s32.totalorder %s187, %s190
      %p196 = scmp.eq.s32.totalorder %s35, 0
      %p197 = por %p195, %p196
      %p198 = scmp.ne.s32.totalorder %s187, %s190
      %p199 = scmp.eq.s32.totalorder %s40, 3
      %p200 = por %p198, %p199
      %p201 = scmp.ne.s32.totalorder %s190, %s191
      %p202 = scmp.eq.s32.totalorder %s40, 0
      %p203 = por %p201, %p202
      %p204 = scmp.ne.s32.totalorder %s190, %s191
      %p205 = scmp.eq.s32.totalorder %s41, 3
      %p206 = por %p204, %p205
      %p208 = scmp.ne.s32.totalorder %s191, %s207
      %p209 = scmp.eq.s32.totalorder %s41, 0
      %p210 = por %p208, %p209
      %s211 = ssub.s32 %s43, %s50
      %p212 = scmp.eq.s32.totalorder %s211, 0
      %s214 = sadd.s32 %s213, 1
      %s215 = scalar_select %p212, %s213, %s214
      %p218 = pneg %p212
      %p219 = scmp.eq.s32.totalorder %s35, 3
      %p220 = por %p218, %p219
      %p221 = scmp.ne.s32.totalorder %s213, %s216
      %p222 = scmp.eq.s32.totalorder %s35, 0
      %p223 = por %p221, %p222
      %p224 = scmp.ne.s32.totalorder %s213, %s216
      %p225 = scmp.eq.s32.totalorder %s40, 3
      %p226 = por %p224, %p225
      %p227 = scmp.ne.s32.totalorder %s216, %s217
      %p228 = scmp.eq.s32.totalorder %s40, 0
      %p229 = por %p227, %p228
      %p230 = scmp.ne.s32.totalorder %s216, %s217
      %p231 = scmp.eq.s32.totalorder %s41, 3
      %p232 = por %p230, %p231
      %p234 = scmp.ne.s32.totalorder %s217, %s233
      %p235 = scmp.eq.s32.totalorder %s41, 0
      %p236 = por %p234, %p235
      %s237 = ssub.s32 %s43, %s50
      %p238 = scmp.eq.s32.totalorder %s237, 0
      %s240 = sadd.s32 %s239, 1
      %s241 = scalar_select %p238, %s239, %s240
      %p244 = pneg %p238
      %p245 = scmp.eq.s32.totalorder %s35, 3
      %p246 = por %p244, %p245
      %p247 = scmp.ne.s32.totalorder %s239, %s242
      %p248 = scmp.eq.s32.totalorder %s35, 0
      %p249 = por %p247, %p248
      %p250 = scmp.ne.s32.totalorder %s239, %s242
      %p251 = scmp.eq.s32.totalorder %s40, 3
      %p252 = por %p250, %p251
      %p253 = scmp.ne.s32.totalorder %s242, %s243
      %p254 = scmp.eq.s32.totalorder %s40, 0
      %p255 = por %p253, %p254
      %p256 = scmp.ne.s32.totalorder %s242, %s243
      %p257 = scmp.eq.s32.totalorder %s41, 3
      %p258 = por %p256, %p257
      %p260 = scmp.ne.s32.totalorder %s243, %s259
      %p261 = scmp.eq.s32.totalorder %s41, 0
      %p262 = por %p260, %p261
      %s263 = ssub.s32 %s43, %s50
      %p264 = scmp.eq.s32.totalorder %s263, 0
      %s266 = sadd.s32 %s265, 1
      %s267 = scalar_select %p264, %s265, %s266
      %p270 = pneg %p264
      %p271 = scmp.eq.s32.totalorder %s35, 3
      %p272 = por %p270, %p271
      %p273 = scmp.ne.s32.totalorder %s265, %s268
      %p274 = scmp.eq.s32.totalorder %s35, 0
      %p275 = por %p273, %p274
      %p276 = scmp.ne.s32.totalorder %s265, %s268
      %p277 = scmp.eq.s32.totalorder %s40, 3
      %p278 = por %p276, %p277
      %p279 = scmp.ne.s32.totalorder %s268, %s269
      %p280 = scmp.eq.s32.totalorder %s40, 0
      %p281 = por %p279, %p280
      %p282 = scmp.ne.s32.totalorder %s268, %s269
      %p283 = scmp.eq.s32.totalorder %s41, 3
      %p284 = por %p282, %p283
      %p286 = scmp.ne.s32.totalorder %s269, %s285
      %p287 = scmp.eq.s32.totalorder %s41, 0
      %p288 = por %p286, %p287
      %s289 = ssub.s32 %s43, %s50
      %p290 = scmp.eq.s32.totalorder %s289, 0
      %s292 = sadd.s32 %s291, 1
      %s293 = scalar_select %p290, %s291, %s292
      %p296 = pneg %p290
      %p297 = scmp.eq.s32.totalorder %s35, 3
      %p298 = por %p296, %p297
      %p299 = scmp.ne.s32.totalorder %s291, %s294
      %p300 = scmp.eq.s32.totalorder %s35, 0
      %p301 = por %p299, %p300
      %p302 = scmp.ne.s32.totalorder %s291, %s294
      %p303 = scmp.eq.s32.totalorder %s40, 3
      %p304 = por %p302, %p303
      %p305 = scmp.ne.s32.totalorder %s294, %s295
      %p306 = scmp.eq.s32.totalorder %s40, 0
      %p307 = por %p305, %p306
      %p308 = scmp.ne.s32.totalorder %s294, %s295
      %p309 = scmp.eq.s32.totalorder %s41, 3
      %p310 = por %p308, %p309
      %p312 = scmp.ne.s32.totalorder %s295, %s311
      %p313 = scmp.eq.s32.totalorder %s41, 0
      %p314 = por %p312, %p313
      %s315 = ssub.s32 %s43, %s50
      %p316 = scmp.eq.s32.totalorder %s315, 0
      %s318 = sadd.s32 %s317, 1
      %s319 = scalar_select %p316, %s317, %s318
      %p322 = pneg %p316
      %p323 = scmp.eq.s32.totalorder %s35, 3
      %p324 = por %p322, %p323
      %p325 = scmp.ne.s32.totalorder %s317, %s320
      %p326 = scmp.eq.s32.totalorder %s35, 0
      %p327 = por %p325, %p326
      %p328 = scmp.ne.s32.totalorder %s317, %s320
      %p329 = scmp.eq.s32.totalorder %s40, 3
      %p330 = por %p328, %p329
      %p331 = scmp.ne.s32.totalorder %s320, %s321
      %p332 = scmp.eq.s32.totalorder %s40, 0
      %p333 = por %p331, %p332
      %p334 = scmp.ne.s32.totalorder %s320, %s321
      %p335 = scmp.eq.s32.totalorder %s41, 3
      %p336 = por %p334, %p335
      %p338 = scmp.ne.s32.totalorder %s321, %s337
      %p339 = scmp.eq.s32.totalorder %s41, 0
      %p340 = por %p338, %p339
      %s341 = ssub.s32 %s43, %s50
      %p342 = scmp.eq.s32.totalorder %s341, 0
      %s344 = sadd.s32 %s343, 1
      %s345 = scalar_select %p342, %s343, %s344
      %p348 = pneg %p342
      %p349 = scmp.eq.s32.totalorder %s35, 3
      %p350 = por %p348, %p349
      %p351 = scmp.ne.s32.totalorder %s343, %s346
      %p352 = scmp.eq.s32.totalorder %s35, 0
      %p353 = por %p351, %p352
      %p354 = scmp.ne.s32.totalorder %s343, %s346
      %p355 = scmp.eq.s32.totalorder %s40, 3
      %p356 = por %p354, %p355
      %p357 = scmp.ne.s32.totalorder %s346, %s347
      %p358 = scmp.eq.s32.totalorder %s40, 0
      %p359 = por %p357, %p358
      %p360 = scmp.ne.s32.totalorder %s346, %s347
      %p361 = scmp.eq.s32.totalorder %s41, 3
      %p362 = por %p360, %p361
      %p364 = scmp.ne.s32.totalorder %s347, %s363
      %p365 = scmp.eq.s32.totalorder %s41, 0
      %p366 = por %p364, %p365
      %s368 = sadd.s32 %s367, 1
      %p371 = scmp.eq.s32.totalorder %s35, 3
      %p372 = scmp.ne.s32.totalorder %s367, %s369
      %p373 = scmp.eq.s32.totalorder %s35, 0
      %p374 = por %p372, %p373
      %p375 = scmp.ne.s32.totalorder %s367, %s369
      %p376 = scmp.eq.s32.totalorder %s40, 3
      %p377 = por %p375, %p376
      %p378 = scmp.ne.s32.totalorder %s369, %s370
      %p379 = scmp.eq.s32.totalorder %s40, 0
      %p380 = por %p378, %p379
      %p381 = scmp.ne.s32.totalorder %s369, %s370
      %p382 = scmp.eq.s32.totalorder %s41, 3
      %p383 = por %p381, %p382
      %p385 = scmp.ne.s32.totalorder %s370, %s384
      %p386 = scmp.eq.s32.totalorder %s41, 0
      %p387 = por %p385, %p386
      %s389 = sadd.s32 %s388, 1
      %p392 = scmp.eq.s32.totalorder %s35, 3
      %p393 = scmp.ne.s32.totalorder %s388, %s390
      %p394 = scmp.eq.s32.totalorder %s35, 0
      %p395 = por %p393, %p394
      %p396 = scmp.ne.s32.totalorder %s388, %s390
      %p397 = scmp.eq.s32.totalorder %s40, 3
      %p398 = por %p396, %p397
      %p399 = scmp.ne.s32.totalorder %s390, %s391
      %p400 = scmp.eq.s32.totalorder %s40, 0
      %p401 = por %p399, %p400
      %p402 = scmp.ne.s32.totalorder %s390, %s391
      %p403 = scmp.eq.s32.totalorder %s41, 3
      %p404 = por %p402, %p403
      %p406 = scmp.ne.s32.totalorder %s391, %s405
      %p407 = scmp.eq.s32.totalorder %s41, 0
      %p408 = por %p406, %p407
      %s409 = ssub.s32 %s42, %s54
      %p410 = scmp.eq.s32.totalorder %s409, 0
      %s412 = sadd.s32 %s411, 1
      %s413 = scalar_select %p410, %s411, %s412
      %p416 = pneg %p410
      %p417 = scmp.eq.s32.totalorder %s35, 3
      %p418 = por %p416, %p417
      %p419 = scmp.ne.s32.totalorder %s411, %s414
      %p420 = scmp.eq.s32.totalorder %s35, 0
      %p421 = por %p419, %p420
      %p422 = scmp.ne.s32.totalorder %s411, %s414
      %p423 = scmp.eq.s32.totalorder %s40, 3
      %p424 = por %p422, %p423
      %p425 = scmp.ne.s32.totalorder %s414, %s415
      %p426 = scmp.eq.s32.totalorder %s40, 0
      %p427 = por %p425, %p426
      %p428 = scmp.ne.s32.totalorder %s414, %s415
      %p429 = scmp.eq.s32.totalorder %s41, 3
      %p430 = por %p428, %p429
      %p432 = scmp.ne.s32.totalorder %s415, %s431
      %p433 = scmp.eq.s32.totalorder %s41, 0
      %p434 = por %p432, %p433
      %p435 = scmp.le.s32.totalorder 1, %s35
      %p436 = scmp.lt.s32.totalorder %s35, 5
      %p437 = pnand %p435, %p436
      %p438 = pneg %p437
      // Predicated region
      $region9: #{transformer_forward.1} parent=5 // pred_check
        _
      $region10: #{transformer_forward.1} parent=5 // pred_check_branch
        %440 = sbr.rel (%p437) target = $region12
      $region11: #{transformer_forward.1} parent=5 // pred_region
        %s441 = ssub.s32 %s35, 1
        // Predicated region
        $region13: #{transformer_forward.1} parent=11 // pred_check
          %p442 = pneg %p380
        $region14: #{transformer_forward.1} parent=11 // pred_check_branch
          %444 = sbr.rel (%p442) target = $region16
        $region15: #{transformer_forward.1} parent=11 // pred_region
          _
        $region16: #{transformer_forward.1} parent=11 // pred_fallthru
          _
        // Predicated region
        $region17: #{transformer_forward.1} parent=11 // pred_check
          %p445 = pneg %p401
        $region18: #{transformer_forward.1} parent=11 // pred_check_branch
          %447 = sbr.rel (%p445) target = $region20
        $region19: #{transformer_forward.1} parent=11 // pred_region
          _
        $region20: #{transformer_forward.1} parent=11 // pred_fallthru
          _
      $region12: #{transformer_forward.1} parent=5 // pred_fallthru
        _
      %p448 = scmp.lt.s32.totalorder %s35, 4
      // Predicated region
      $region21: #{transformer_forward.1} parent=5 // pred_check
        %p449 = pneg %p448
      $region22: #{transformer_forward.1} parent=5 // pred_check_branch
        %451 = sbr.rel (%p449) target = $region24
      $region23: #{transformer_forward.1} parent=5 // pred_region
        // Predicated region
        $region25: #{transformer_forward.1} parent=23 // pred_check
          %p452 = pneg %p67
        $region26: #{transformer_forward.1} parent=23 // pred_check_branch
          %454 = sbr.rel (%p452) target = $region28
        $region27: #{transformer_forward.1} parent=23 // pred_region
          %s455 = sand.u32 %s57, 1
          %s456 = scalar_lea.sflag [#allocation4], %s455
          %s457 = sand.u32 %s57, 1
          %s458 = smul.addr %s457, 8
          %s459 = scalar_lea.vmem [#allocation3], %s458
          %461 = vsyncadd %s456, 0
          %s462 = smul.addr %s42, 8
          %s463 = scalar_lea.hbm %s0, %s462
          %s465 = sshll.u32 %s463, 4
          %s466 = int_to_ptr.hbm [resolvable:$true] %s465
          %s467 = sshll.u32 %s459, 4
          %s468 = int_to_ptr.vmem [resolvable:$true] %s467
          %470 = dma.hbm_to_vmem [thread:$0]  %s466, 128, %s468, %s456
        $region28: #{transformer_forward.1} parent=23 // pred_fallthru
          _
        // Predicated region
        $region29: #{transformer_forward.1} parent=23 // pred_check
          %p471 = pneg %p93
        $region30: #{transformer_forward.1} parent=23 // pred_check_branch
          %473 = sbr.rel (%p471) target = $region32
        $region31: #{transformer_forward.1} parent=23 // pred_region
          %p474 = scmp.lt.s32.totalorder %s43, 1
          %s475 = scalar_select %p474, %s43, 1
          %s476 = scalar_lea.vmem %s1, %s475
        $region32: #{transformer_forward.1} parent=23 // pred_fallthru
          _
        // Predicated region
        $region33: #{transformer_forward.1} parent=23 // pred_check
          %p477 = pneg %p119
        $region34: #{transformer_forward.1} parent=23 // pred_check_branch
          %479 = sbr.rel (%p477) target = $region36
        $region35: #{transformer_forward.1} parent=23 // pred_region
          %s480 = sand.u32 %s35, 1
          %s481 = scalar_lea.sflag [#allocation7], %s480
          %s482 = sand.u32 %s109, 1
          %s483 = scalar_lea.vmem [#allocation6], %s482
          %485 = vsyncadd %s481, 0
          %s486 = scalar_lea.hbm %s2, %s43
          %s488 = sshll.u32 %s486, 4
          %s489 = int_to_ptr.hbm [resolvable:$true] %s488
          %s490 = sshll.u32 %s483, 4
          %s491 = int_to_ptr.vmem [resolvable:$true] %s490
          %493 = dma.hbm_to_vmem [thread:$0]  %s489, 16, %s491, %s481
        $region36: #{transformer_forward.1} parent=23 // pred_fallthru
          _
        // Predicated region
        $region37: #{transformer_forward.1} parent=23 // pred_check
          %p494 = pneg %p145
        $region38: #{transformer_forward.1} parent=23 // pred_check_branch
          %496 = sbr.rel (%p494) target = $region40
        $region39: #{transformer_forward.1} parent=23 // pred_region
          %p497 = scmp.lt.s32.totalorder %s43, 1
          %s498 = scalar_select %p497, %s43, 1
          %s499 = smul.addr %s498, 4
          %s500 = smul.addr %s499, 4
          %s501 = scalar_lea.vmem %s3, %s500
        $region40: #{transformer_forward.1} parent=23 // pred_fallthru
          _
        // Predicated region
        $region41: #{transformer_forward.1} parent=23 // pred_check
          %p502 = pneg %p171
        $region42: #{transformer_forward.1} parent=23 // pred_check_branch
          %504 = sbr.rel (%p502) target = $region44
        $region43: #{transformer_forward.1} parent=23 // pred_region
          %p505 = scmp.lt.s32.totalorder %s43, 1
          %s506 = scalar_select %p505, %s43, 1
          %s507 = smul.addr %s506, 4
          %s508 = smul.addr %s507, 4
          %s509 = scalar_lea.vmem %s4, %s508
        $region44: #{transformer_forward.1} parent=23 // pred_fallthru
          _
        // Predicated region
        $region45: #{transformer_forward.1} parent=23 // pred_check
          %p510 = pneg %p197
        $region46: #{transformer_forward.1} parent=23 // pred_check_branch
          %512 = sbr.rel (%p510) target = $region48
        $region47: #{transformer_forward.1} parent=23 // pred_region
          %s513 = sand.u32 %s35, 1
          %s514 = scalar_lea.sflag [#allocation7], %s513
          %s515 = sand.u32 %s187, 1
          %s516 = scalar_lea.vmem [#allocation8], %s515
          %518 = vsyncadd %s514, 0
          %s519 = scalar_lea.hbm %s5, %s43
          %s521 = sshll.u32 %s519, 4
          %s522 = int_to_ptr.hbm [resolvable:$true] %s521
          %s523 = sshll.u32 %s516, 4
          %s524 = int_to_ptr.vmem [resolvable:$true] %s523
          %526 = dma.hbm_to_vmem [thread:$0]  %s522, 16, %s524, %s514
        $region48: #{transformer_forward.1} parent=23 // pred_fallthru
          _
        // Predicated region
        $region49: #{transformer_forward.1} parent=23 // pred_check
          %p527 = pneg %p223
        $region50: #{transformer_forward.1} parent=23 // pred_check_branch
          %529 = sbr.rel (%p527) target = $region52
        $region51: #{transformer_forward.1} parent=23 // pred_region
          %p530 = scmp.lt.s32.totalorder %s43, 1
          %s531 = scalar_select %p530, %s43, 1
          %s532 = scalar_lea.vmem %s6, %s531
        $region52: #{transformer_forward.1} parent=23 // pred_fallthru
          _
        // Predicated region
        $region53: #{transformer_forward.1} parent=23 // pred_check
          %p533 = pneg %p249
        $region54: #{transformer_forward.1} parent=23 // pred_check_branch
          %535 = sbr.rel (%p533) target = $region56
        $region55: #{transformer_forward.1} parent=23 // pred_region
          %s536 = sand.u32 %s35, 1
          %s537 = scalar_lea.sflag [#allocation10], %s536
          %s538 = sand.u32 %s239, 1
          %s539 = scalar_lea.vmem [#allocation9], %s538
          %541 = vsyncadd %s537, 0
          %s542 = scalar_lea.hbm %s7, %s43
          %s544 = sshll.u32 %s542, 4
          %s545 = int_to_ptr.hbm [resolvable:$true] %s544
          %s546 = sshll.u32 %s539, 4
          %s547 = int_to_ptr.vmem [resolvable:$true] %s546
          %549 = dma.hbm_to_vmem [thread:$0]  %s545, 16, %s547, %s537
        $region56: #{transformer_forward.1} parent=23 // pred_fallthru
          _
        // Predicated region
        $region57: #{transformer_forward.1} parent=23 // pred_check
          %p550 = pneg %p275
        $region58: #{transformer_forward.1} parent=23 // pred_check_branch
          %552 = sbr.rel (%p550) target = $region60
        $region59: #{transformer_forward.1} parent=23 // pred_region
          %p553 = scmp.lt.s32.totalorder %s43, 1
          %s554 = scalar_select %p553, %s43, 1
          %s555 = smul.addr %s554, 4
          %s556 = smul.addr %s555, 4
          %s557 = scalar_lea.vmem %s8, %s556
        $region60: #{transformer_forward.1} parent=23 // pred_fallthru
          _
        // Predicated region
        $region61: #{transformer_forward.1} parent=23 // pred_check
          %p558 = pneg %p301
        $region62: #{transformer_forward.1} parent=23 // pred_check_branch
          %560 = sbr.rel (%p558) target = $region64
        $region63: #{transformer_forward.1} parent=23 // pred_region
          %s561 = sand.u32 %s35, 1
          %s562 = scalar_lea.sflag [#allocation10], %s561
          %s563 = sand.u32 %s291, 1
          %s564 = scalar_lea.vmem [#allocation11], %s563
          %566 = vsyncadd %s562, 0
          %s567 = scalar_lea.hbm %s9, %s43
          %s569 = sshll.u32 %s567, 4
          %s570 = int_to_ptr.hbm [resolvable:$true] %s569
          %s571 = sshll.u32 %s564, 4
          %s572 = int_to_ptr.vmem [resolvable:$true] %s571
          %574 = dma.hbm_to_vmem [thread:$0]  %s570, 16, %s572, %s562
        $region64: #{transformer_forward.1} parent=23 // pred_fallthru
          _
        // Predicated region
        $region65: #{transformer_forward.1} parent=23 // pred_check
          %p575 = pneg %p327
        $region66: #{transformer_forward.1} parent=23 // pred_check_branch
          %577 = sbr.rel (%p575) target = $region68
        $region67: #{transformer_forward.1} parent=23 // pred_region
          %p578 = scmp.lt.s32.totalorder %s43, 1
          %s579 = scalar_select %p578, %s43, 1
          %s580 = smul.addr %s579, 8
          %s581 = smul.addr %s580, 4
          %s582 = scalar_lea.vmem %s10, %s581
        $region68: #{transformer_forward.1} parent=23 // pred_fallthru
          _
        // Predicated region
        $region69: #{transformer_forward.1} parent=23 // pred_check
          %p583 = pneg %p353
        $region70: #{transformer_forward.1} parent=23 // pred_check_branch
          %585 = sbr.rel (%p583) target = $region72
        $region71: #{transformer_forward.1} parent=23 // pred_region
          %s586 = sand.u32 %s343, 1
          %s587 = scalar_lea.sflag [#allocation13], %s586
          %s588 = sand.u32 %s343, 1
          %s589 = scalar_lea.vmem [#allocation12], %s588
          %591 = vsyncadd %s587, 0
          %s592 = scalar_lea.hbm %s11, %s43
          %s594 = sshll.u32 %s592, 4
          %s595 = int_to_ptr.hbm [resolvable:$true] %s594
          %s596 = sshll.u32 %s589, 4
          %s597 = int_to_ptr.vmem [resolvable:$true] %s596
          %599 = dma.hbm_to_vmem [thread:$0]  %s595, 16, %s597, %s587
        $region72: #{transformer_forward.1} parent=23 // pred_fallthru
          _
      $region24: #{transformer_forward.1} parent=5 // pred_fallthru
        _
      %p600 = scmp.le.s32.totalorder 1, %s35
      %p601 = scmp.lt.s32.totalorder %s35, 5
      %p602 = pnand %p600, %p601
      %p603 = pneg %p602
      // Predicated region
      $region73: #{transformer_forward.1} parent=5 // pred_check
        _
      $region74: #{transformer_forward.1} parent=5 // pred_check_branch
        %605 = sbr.rel (%p602) target = $region76
      $region75: #{transformer_forward.1} parent=5 // pred_region
        %s606 = ssub.s32 %s35, 1
        %s607 = sand.u32 %s60, 1
        %s608 = scalar_lea.sflag [#allocation4], %s607
        %s609 = sand.u32 %s60, 1
        %s610 = smul.addr %s609, 8
        %s611 = scalar_lea.vmem [#allocation3], %s610
        // Predicated region
        $region77: #{transformer_forward.1} parent=75 // pred_check
          %p612 = pneg %p73
        $region78: #{transformer_forward.1} parent=75 // pred_check_branch
          %614 = sbr.rel (%p612) target = $region80
        $region79: #{transformer_forward.1} parent=75 // pred_region
          %616 = dma.done %s608, 128
        $region80: #{transformer_forward.1} parent=75 // pred_fallthru
          _
        %s617 = sand.u32 %s40, 1
        %s618 = scalar_lea.sflag [#allocation7], %s617
        %s619 = sand.u32 %s112, 1
        %s620 = scalar_lea.vmem [#allocation6], %s619
        // Predicated region
        $region81: #{transformer_forward.1} parent=75 // pred_check
          %p621 = pneg %p125
        $region82: #{transformer_forward.1} parent=75 // pred_check_branch
          %623 = sbr.rel (%p621) target = $region84
        $region83: #{transformer_forward.1} parent=75 // pred_region
          %625 = dma.done %s618, 16
        $region84: #{transformer_forward.1} parent=75 // pred_fallthru
          _
        %s626 = sand.u32 %s40, 1
        %s627 = scalar_lea.sflag [#allocation7], %s626
        %s628 = sand.u32 %s190, 1
        %s629 = scalar_lea.vmem [#allocation8], %s628
        // Predicated region
        $region85: #{transformer_forward.1} parent=75 // pred_check
          %p630 = pneg %p203
        $region86: #{transformer_forward.1} parent=75 // pred_check_branch
          %632 = sbr.rel (%p630) target = $region88
        $region87: #{transformer_forward.1} parent=75 // pred_region
          %634 = dma.done %s627, 16
        $region88: #{transformer_forward.1} parent=75 // pred_fallthru
          _
        %s635 = sand.u32 %s40, 1
        %s636 = scalar_lea.sflag [#allocation10], %s635
        %s637 = sand.u32 %s242, 1
        %s638 = scalar_lea.vmem [#allocation9], %s637
        // Predicated region
        $region89: #{transformer_forward.1} parent=75 // pred_check
          %p639 = pneg %p255
        $region90: #{transformer_forward.1} parent=75 // pred_check_branch
          %641 = sbr.rel (%p639) target = $region92
        $region91: #{transformer_forward.1} parent=75 // pred_region
          %643 = dma.done %s636, 16
        $region92: #{transformer_forward.1} parent=75 // pred_fallthru
          _
        %s644 = sand.u32 %s40, 1
        %s645 = scalar_lea.sflag [#allocation10], %s644
        %s646 = sand.u32 %s294, 1
        %s647 = scalar_lea.vmem [#allocation11], %s646
        // Predicated region
        $region93: #{transformer_forward.1} parent=75 // pred_check
          %p648 = pneg %p307
        $region94: #{transformer_forward.1} parent=75 // pred_check_branch
          %650 = sbr.rel (%p648) target = $region96
        $region95: #{transformer_forward.1} parent=75 // pred_region
          %652 = dma.done %s645, 16
        $region96: #{transformer_forward.1} parent=75 // pred_fallthru
          _
        %s653 = sand.u32 %s346, 1
        %s654 = scalar_lea.sflag [#allocation13], %s653
        %s655 = sand.u32 %s346, 1
        %s656 = scalar_lea.vmem [#allocation12], %s655
        // Predicated region
        $region97: #{transformer_forward.1} parent=75 // pred_check
          %p657 = pneg %p359
        $region98: #{transformer_forward.1} parent=75 // pred_check_branch
          %659 = sbr.rel (%p657) target = $region100
        $region99: #{transformer_forward.1} parent=75 // pred_region
          %661 = dma.done %s654, 16
        $region100: #{transformer_forward.1} parent=75 // pred_fallthru
          _
        %s662 = sand.u32 %s60, 1
        %s663 = scalar_lea.sflag [#allocation4], %s662
        %s664 = sand.u32 %s60, 1
        %s665 = smul.addr %s664, 8
        %s666 = scalar_lea.vmem [#allocation3], %s665
        %p667 = pneg %p73
        %p668 = pneg %p70
        %p669 = scmp.lt.s32.totalorder %s45, 1
        %s670 = scalar_select %p669, %s45, 1
        %s671 = scalar_lea.vmem %s1, %s670
        %p672 = pneg %p99
        %p673 = pneg %p96
        %s674 = sand.u32 %s40, 1
        %s675 = scalar_lea.sflag [#allocation7], %s674
        %s676 = sand.u32 %s112, 1
        %s677 = scalar_lea.vmem [#allocation6], %s676
        %p678 = pneg %p125
        %p679 = pneg %p122
        %p680 = scmp.lt.s32.totalorder %s45, 1
        %s681 = scalar_select %p680, %s45, 1
        %s682 = smul.addr %s681, 4
        %s683 = smul.addr %s682, 4
        %s684 = scalar_lea.vmem %s3, %s683
        %p685 = pneg %p151
        %p686 = pneg %p148
        %p687 = scmp.lt.s32.totalorder %s45, 1
        %s688 = scalar_select %p687, %s45, 1
        %s689 = smul.addr %s688, 4
        %s690 = smul.addr %s689, 4
        %s691 = scalar_lea.vmem %s4, %s690
        %p692 = pneg %p177
        %p693 = pneg %p174
        %s694 = sand.u32 %s40, 1
        %s695 = scalar_lea.sflag [#allocation7], %s694
        %s696 = sand.u32 %s190, 1
        %s697 = scalar_lea.vmem [#allocation8], %s696
        %p698 = pneg %p203
        %p699 = pneg %p200
        %p700 = scmp.lt.s32.totalorder %s45, 1
        %s701 = scalar_select %p700, %s45, 1
        %s702 = scalar_lea.vmem %s6, %s701
        %p703 = pneg %p229
        %p704 = pneg %p226
        %s705 = sand.u32 %s40, 1
        %s706 = scalar_lea.sflag [#allocation10], %s705
        %s707 = sand.u32 %s242, 1
        %s708 = scalar_lea.vmem [#allocation9], %s707
        %p709 = pneg %p255
        %p710 = pneg %p252
        %p711 = scmp.lt.s32.totalorder %s45, 1
        %s712 = scalar_select %p711, %s45, 1
        %s713 = smul.addr %s712, 4
        %s714 = smul.addr %s713, 4
        %s715 = scalar_lea.vmem %s8, %s714
        %p716 = pneg %p281
        %p717 = pneg %p278
        %s718 = sand.u32 %s40, 1
        %s719 = scalar_lea.sflag [#allocation10], %s718
        %s720 = sand.u32 %s294, 1
        %s721 = scalar_lea.vmem [#allocation11], %s720
        %p722 = pneg %p307
        %p723 = pneg %p304
        %p724 = scmp.lt.s32.totalorder %s45, 1
        %s725 = scalar_select %p724, %s45, 1
        %s726 = smul.addr %s725, 8
        %s727 = smul.addr %s726, 4
        %s728 = scalar_lea.vmem %s10, %s727
        %p729 = pneg %p333
        %p730 = pneg %p330
        %s731 = sand.u32 %s346, 1
        %s732 = scalar_lea.sflag [#allocation13], %s731
        %s733 = sand.u32 %s346, 1
        %s734 = scalar_lea.vmem [#allocation12], %s733
        %p735 = pneg %p359
        %p736 = pneg %p356
        %p737 = pneg %p380
        %p738 = pneg %p377
        %p739 = pneg %p401
        %p740 = pneg %p398
        %p741 = pneg %p427
        %p742 = pneg %p424
        %s743 = sand.u32 %s414, 1
        %s744 = scalar_lea.sflag [#allocation5], %s743
        %s745 = sand.u32 %s414, 1
        %s746 = smul.addr %s745, 8
        %s747 = scalar_lea.vmem [#allocation14], %s746
        %p748 = scmp.lt.s32.totalorder %s45, 1
        %s749 = scalar_select %p748, %s45, 1
        %s750 = scalar_lea.vmem %s1, %s749
        %p751 = scmp.lt.s32.totalorder %s45, 1
        %s752 = scalar_select %p751, %s45, 1
        %s753 = smul.addr %s752, 4
        %s754 = smul.addr %s753, 4
        %s755 = scalar_lea.vmem %s3, %s754
        %p756 = scmp.lt.s32.totalorder %s45, 1
        %s757 = scalar_select %p756, %s45, 1
        %s758 = smul.addr %s757, 4
        %s759 = smul.addr %s758, 4
        %s760 = scalar_lea.vmem %s4, %s759
        %p761 = scmp.lt.s32.totalorder %s45, 1
        %s762 = scalar_select %p761, %s45, 1
        %s763 = scalar_lea.vmem %s6, %s762
        %p764 = scmp.lt.s32.totalorder %s45, 1
        %s765 = scalar_select %p764, %s45, 1
        %s766 = smul.addr %s765, 4
        %s767 = smul.addr %s766, 4
        %s768 = scalar_lea.vmem %s8, %s767
        %p769 = scmp.lt.s32.totalorder %s45, 1
        %s770 = scalar_select %p769, %s45, 1
        %s771 = smul.addr %s770, 8
        %s772 = smul.addr %s771, 4
        %s773 = scalar_lea.vmem %s10, %s772
        %p775 = scmp.eq.s32.totalorder %s45, 0
        // Predicated region
        $region101: #{transformer_forward.1} parent=75 // pred_check
          %p776 = pneg %p775
        $region102: #{transformer_forward.1} parent=75 // pred_check_branch
          %778 = sbr.rel (%p776) target = $region104
        $region103: #{transformer_forward.1} parent=75 // pred_region
          %v779 = vld [vmem:[%s611] sm:$0xff]
          %vm780 = vcmask 261120
          %781 = vst.msk [vmem:[#allocation2] sm:$0xff] %vm780, %v779
        $region104: #{transformer_forward.1} parent=75 // pred_fallthru
          _
        %v782 = vld [vmem:[#allocation2] sm:$0xff]
        %v783 = vld [vmem:[%s750] sm:$0x1]
        %v784 = vld [vmem:[%s620] sm:$0x1]
        %vm785 = vcmask 261120
        %v786 = vsel %vm785, %v782, 0.0
        %787 = vadd.xlane.f32.xlu0 %v786
        %v788 = vpop.xlane.xlu0 %787
        %v789 = vrcp.pop 32.0
        %v790 = vmul.f32 32.0, %v789
        %v791 = vsub.f32 1.0, %v790
        %v792 = vmul.f32 %v789, %v791
        %v793 = vadd.f32 %v789, %v792
        %vm794 = vweird.f32 %v789
        %v795 = vsel %vm794, %v789, %v793
        %v796 = vmul.f32 %v788, %v795
        %v797 = vsub.f32 %v782, %v796
        %v798 = vmul.f32 %v797, %v797
        %v799 = vsel %vm785, %v798, 0.0
        %800 = vadd.xlane.f32.xlu0 %v799
        %v801 = vpop.xlane.xlu0 %800
        %v802 = vmul.f32 %v801, %v795
        %v803 = vadd.f32 %v802, 1e-05
        %v804 = vrsqrt.pop %v803
        %v805 = vmul.f32 %v804, %v803
        %v806 = vmul.f32 %v805, %v804
        %v807 = vmul.f32 0.5, %v806
        %v808 = vsub.f32 1.5, %v807
        %v809 = vmul.f32 %v804, %v808
        %vm810 = vweird.f32 %v803
        %vm811 = vweird.f32 %v804
        %vm812 = vmor %vm810, %vm811
        %v813 = vsel %vm812, %v804, %v809
        %v814 = vmul.f32 %v797, %v813
        %v816 = vperm.slane %v783, 0
        %v818 = vmul.f32 %v814, %v816
        %v820 = vperm.slane %v784, 0
        %v822 = vadd.f32 %v818, %v820
        %v823 = vpack.c.bf16 %v822, %v822
        %v824 = vld [vmem:[%s755] sm:$0xf]
        %v825 = vld [vmem:[%s755 + $0x4] sm:$0xf]
        %v826 = vld [vmem:[%s755 + $0x8] sm:$0xf]
        %v827 = vld [vmem:[%s755 + $0xc] sm:$0xf]
        %v832 = vunpack.c.l.b16 %v824
        %v833 = vunpack.c.l.b16 %v825
        %v834 = vunpack.c.l.b16 %v826
        %v835 = vunpack.c.l.b16 %v827
        %v836 = vpack.c.b16 %v833, %v832
        %v837 = vpack.c.b16 %v835, %v834
        %v841 = vsel %vm785, %v823, 0
        %843 = vmatpush.bf16.msra.mxu0 0
        %844 = vmatpush.bf16.msra.mxu0 0
        %845 = vmatpush.bf16.msra.mxu0 0
        %846 = vmatpush.bf16.msra.mxu0 0
        %847 = vmatpush.bf16.msra.mxu0 0
        %848 = vmatpush.bf16.msra.mxu0 0
        %849 = vmatpush.bf16.msra.mxu0 %v837
        %850 = vmatpush.bf16.msra.mxu0 %v836
        %851 = vmatmul.bf16.gmra.mxu0 %v841
        %v852 = vpop.f32.mrf.mxu0
        %v853 = vadd.f32 0.0, %v852
        %v854 = vpop.f32.mrf.mxu0
        %855 = vdwg.mxu0
        %v856 = vmul.f32 %v853, 0.35355338
        %v857 = vpack.c.bf16 %v856, %v856
        %v858 = vpack.c.bf16 %v853, %v853
        %860 = vrot.lane.b32.xlu0 %v858, 96
        %v861 = vpop.permute.xlu0 %860
        %vm862 = vcmask 64512
        %v864 = vsel %vm862, %v857, 0
        %v867 = vsel %vm862, %v861, 0
        %869 = vmatpush.bf16.xpose.msra.mxu0 0
        %870 = vmatpush.bf16.xpose.msra.mxu0 0
        %871 = vmatpush.bf16.xpose.msra.mxu0 0
        %872 = vmatpush.bf16.xpose.msra.mxu0 0
        %873 = vmatpush.bf16.xpose.msra.mxu0 0
        %874 = vmatpush.bf16.xpose.msra.mxu0 0
        %875 = vmatpush.bf16.xpose.msra.mxu0 0
        %876 = vmatpush.bf16.xpose.msra.mxu0 %v867
        %877 = vmatmul.bf16.gmra.mxu0 %v864
        %v878 = vpop.f32.mrf.mxu0
        %v879 = vadd.f32 0.0, %v878
        %v880 = vpop.f32.mrf.mxu0
        %881 = vdwg.mxu0
        %v882 = vsel %vm862, %v879, -inf
        %883 = vmax.xlane.f32.xlu0 %v882
        %v884 = vpop.xlane.xlu0 %883
        %v885 = vsub.f32 %v879, %v884
        %v886 = vmul.f32 %v885, 1.442695
        %v887 = vpow.pop %v886
        %v888 = vsel %vm862, %v887, 0.0
        %889 = vadd.xlane.f32.xlu0 %v888
        %v890 = vpop.xlane.xlu0 %889
        %v891 = vrcp.pop %v890
        %v892 = vmul.f32 %v887, %v891
        %v893 = vpack.c.bf16 %v892, %v892
        %894 = vrot.lane.b32.xlu0 %v858, 64
        %v895 = vpop.permute.xlu0 %894
        %v897 = vsel %vm862, %v893, 0
        %vm899 = vcmask 1043456
        %v901 = vsel %vm899, %v895, 0
        %903 = vmatpush.bf16.msra.mxu0 0
        %904 = vmatpush.bf16.msra.mxu0 0
        %905 = vmatpush.bf16.msra.mxu0 0
        %906 = vmatpush.bf16.msra.mxu0 0
        %907 = vmatpush.bf16.msra.mxu0 0
        %908 = vmatpush.bf16.msra.mxu0 0
        %909 = vmatpush.bf16.msra.mxu0 0
        %910 = vmatpush.bf16.msra.mxu0 %v901
        %911 = vmatmul.bf16.gmra.mxu0 %v897
        %v912 = vpop.f32.mrf.mxu0
        %v913 = vadd.f32 0.0, %v912
        %v914 = vpop.f32.mrf.mxu0
        %915 = vdwg.mxu0
        %917 = vrot.lane.b32.xlu0 %v857, 120
        %v918 = vpop.permute.xlu0 %917
        %919 = vrot.lane.b32.xlu0 %v858, 88
        %v920 = vpop.permute.xlu0 %919
        %v922 = vsel %vm862, %v918, 0
        %v925 = vsel %vm862, %v920, 0
        %927 = vmatpush.bf16.xpose.msra.mxu0 0
        %928 = vmatpush.bf16.xpose.msra.mxu0 0
        %929 = vmatpush.bf16.xpose.msra.mxu0 0
        %930 = vmatpush.bf16.xpose.msra.mxu0 0
        %931 = vmatpush.bf16.xpose.msra.mxu0 0
        %932 = vmatpush.bf16.xpose.msra.mxu0 0
        %933 = vmatpush.bf16.xpose.msra.mxu0 0
        %934 = vmatpush.bf16.xpose.msra.mxu0 %v925
        %935 = vmatmul.bf16.gmra.mxu0 %v922
        %v936 = vpop.f32.mrf.mxu0
        %v937 = vadd.f32 0.0, %v936
        %v938 = vpop.f32.mrf.mxu0
        %939 = vdwg.mxu0
        %v940 = vsel %vm862, %v937, -inf
        %941 = vmax.xlane.f32.xlu0 %v940
        %v942 = vpop.xlane.xlu0 %941
        %v943 = vsub.f32 %v937, %v942
        %v944 = vmul.f32 %v943, 1.442695
        %v945 = vpow.pop %v944
        %v946 = vsel %vm862, %v945, 0.0
        %947 = vadd.xlane.f32.xlu0 %v946
        %v948 = vpop.xlane.xlu0 %947
        %v949 = vrcp.pop %v948
        %v950 = vmul.f32 %v945, %v949
        %v951 = vpack.c.bf16 %v950, %v950
        %952 = vrot.lane.b32.xlu0 %v858, 56
        %v953 = vpop.permute.xlu0 %952
        %v955 = vsel %vm862, %v951, 0
        %v958 = vsel %vm899, %v953, 0
        %960 = vmatpush.bf16.msra.mxu0 0
        %961 = vmatpush.bf16.msra.mxu0 0
        %962 = vmatpush.bf16.msra.mxu0 0
        %963 = vmatpush.bf16.msra.mxu0 0
        %964 = vmatpush.bf16.msra.mxu0 0
        %965 = vmatpush.bf16.msra.mxu0 0
        %966 = vmatpush.bf16.msra.mxu0 0
        %967 = vmatpush.bf16.msra.mxu0 %v958
        %968 = vmatmul.bf16.gmra.mxu0 %v955
        %v969 = vpop.f32.mrf.mxu0
        %v970 = vadd.f32 0.0, %v969
        %v971 = vpop.f32.mrf.mxu0
        %972 = vdwg.mxu0
        %973 = vrot.lane.b32.xlu0 %v857, 112
        %v974 = vpop.permute.xlu0 %973
        %975 = vrot.lane.b32.xlu0 %v858, 80
        %v976 = vpop.permute.xlu0 %975
        %v978 = vsel %vm862, %v974, 0
        %v981 = vsel %vm862, %v976, 0
        %983 = vmatpush.bf16.xpose.msra.mxu0 0
        %984 = vmatpush.bf16.xpose.msra.mxu0 0
        %985 = vmatpush.bf16.xpose.msra.mxu0 0
        %986 = vmatpush.bf16.xpose.msra.mxu0 0
        %987 = vmatpush.bf16.xpose.msra.mxu0 0
        %988 = vmatpush.bf16.xpose.msra.mxu0 0
        %989 = vmatpush.bf16.xpose.msra.mxu0 0
        %990 = vmatpush.bf16.xpose.msra.mxu0 %v981
        %991 = vmatmul.bf16.gmra.mxu0 %v978
        %v992 = vpop.f32.mrf.mxu0
        %v993 = vadd.f32 0.0, %v992
        %v994 = vpop.f32.mrf.mxu0
        %995 = vdwg.mxu0
        %v996 = vsel %vm862, %v993, -inf
        %997 = vmax.xlane.f32.xlu0 %v996
        %v998 = vpop.xlane.xlu0 %997
        %v999 = vsub.f32 %v993, %v998
        %v1000 = vmul.f32 %v999, 1.442695
        %v1001 = vpow.pop %v1000
        %v1002 = vsel %vm862, %v1001, 0.0
        %1003 = vadd.xlane.f32.xlu0 %v1002
        %v1004 = vpop.xlane.xlu0 %1003
        %v1005 = vrcp.pop %v1004
        %v1006 = vmul.f32 %v1001, %v1005
        %v1007 = vpack.c.bf16 %v1006, %v1006
        %1008 = vrot.lane.b32.xlu0 %v858, 48
        %v1009 = vpop.permute.xlu0 %1008
        %v1011 = vsel %vm862, %v1007, 0
        %v1014 = vsel %vm899, %v1009, 0
        %1016 = vmatpush.bf16.msra.mxu0 0
        %1017 = vmatpush.bf16.msra.mxu0 0
        %1018 = vmatpush.bf16.msra.mxu0 0
        %1019 = vmatpush.bf16.msra.mxu0 0
        %1020 = vmatpush.bf16.msra.mxu0 0
        %1021 = vmatpush.bf16.msra.mxu0 0
        %1022 = vmatpush.bf16.msra.mxu0 0
        %1023 = vmatpush.bf16.msra.mxu0 %v1014
        %1024 = vmatmul.bf16.gmra.mxu0 %v1011
        %v1025 = vpop.f32.mrf.mxu0
        %v1026 = vadd.f32 0.0, %v1025
        %v1027 = vpop.f32.mrf.mxu0
        %1028 = vdwg.mxu0
        %1029 = vrot.lane.b32.xlu0 %v857, 104
        %v1030 = vpop.permute.xlu0 %1029
        %1031 = vrot.lane.b32.xlu0 %v858, 72
        %v1032 = vpop.permute.xlu0 %1031
        %v1034 = vsel %vm862, %v1030, 0
        %v1037 = vsel %vm862, %v1032, 0
        %1039 = vmatpush.bf16.xpose.msra.mxu0 0
        %1040 = vmatpush.bf16.xpose.msra.mxu0 0
        %1041 = vmatpush.bf16.xpose.msra.mxu0 0
        %1042 = vmatpush.bf16.xpose.msra.mxu0 0
        %1043 = vmatpush.bf16.xpose.msra.mxu0 0
        %1044 = vmatpush.bf16.xpose.msra.mxu0 0
        %1045 = vmatpush.bf16.xpose.msra.mxu0 0
        %1046 = vmatpush.bf16.xpose.msra.mxu0 %v1037
        %1047 = vmatmul.bf16.gmra.mxu0 %v1034
        %v1048 = vpop.f32.mrf.mxu0
        %v1049 = vadd.f32 0.0, %v1048
        %v1050 = vpop.f32.mrf.mxu0
        %1051 = vdwg.mxu0
        %v1052 = vsel %vm862, %v1049, -inf
        %1053 = vmax.xlane.f32.xlu0 %v1052
        %v1054 = vpop.xlane.xlu0 %1053
        %v1055 = vsub.f32 %v1049, %v1054
        %v1056 = vmul.f32 %v1055, 1.442695
        %v1057 = vpow.pop %v1056
        %v1058 = vsel %vm862, %v1057, 0.0
        %1059 = vadd.xlane.f32.xlu0 %v1058
        %v1060 = vpop.xlane.xlu0 %1059
        %v1061 = vrcp.pop %v1060
        %v1062 = vmul.f32 %v1057, %v1061
        %v1063 = vpack.c.bf16 %v1062, %v1062
        %1064 = vrot.lane.b32.xlu0 %v858, 40
        %v1065 = vpop.permute.xlu0 %1064
        %v1067 = vsel %vm862, %v1063, 0
        %v1070 = vsel %vm899, %v1065, 0
        %1072 = vmatpush.bf16.msra.mxu0 0
        %1073 = vmatpush.bf16.msra.mxu0 0
        %1074 = vmatpush.bf16.msra.mxu0 0
        %1075 = vmatpush.bf16.msra.mxu0 0
        %1076 = vmatpush.bf16.msra.mxu0 0
        %1077 = vmatpush.bf16.msra.mxu0 0
        %1078 = vmatpush.bf16.msra.mxu0 0
        %1079 = vmatpush.bf16.msra.mxu0 %v1070
        %1080 = vmatmul.bf16.gmra.mxu0 %v1067
        %v1081 = vpop.f32.mrf.mxu0
        %v1082 = vadd.f32 0.0, %v1081
        %v1083 = vpop.f32.mrf.mxu0
        %1084 = vdwg.mxu0
        %1086 = vrot.lane.b32.xlu0 %v970, 8
        %v1087 = vpop.permute.xlu0 %1086
        %1090 = vrot.lane.b32.xlu0 %v1026, 16
        %v1091 = vpop.permute.xlu0 %1090
        %1094 = vrot.lane.b32.xlu0 %v1082, 24
        %v1095 = vpop.permute.xlu0 %1094
        %v1097 = vsel %vm862, %v913, %v1087
        %vm1098 = vcmask 130048
        %v1099 = vsel %vm1098, %v1097, %v1091
        %vm1100 = vcmask 195584
        %v1101 = vsel %vm1100, %v1099, %v1095
        %v1102 = vpack.c.bf16 %v1101, %v1101
        %v1103 = vld [vmem:[%s760] sm:$0xf]
        %v1104 = vld [vmem:[%s760 + $0x4] sm:$0xf]
        %v1105 = vld [vmem:[%s760 + $0x8] sm:$0xf]
        %v1106 = vld [vmem:[%s760 + $0xc] sm:$0xf]
        %v1107 = vld [vmem:[%s629] sm:$0x1]
        %v1109 = vperm.slane %v1107, 0
        %v1115 = vunpack.c.l.b16 %v1103
        %v1116 = vunpack.c.l.b16 %v1104
        %v1117 = vunpack.c.l.b16 %v1105
        %v1118 = vunpack.c.l.b16 %v1106
        %v1119 = vpack.c.b16 %v1116, %v1115
        %v1120 = vpack.c.b16 %v1118, %v1117
        %v1124 = vsel %vm785, %v1102, 0
        %1126 = vmatpush.bf16.msra.mxu0 0
        %1127 = vmatpush.bf16.msra.mxu0 0
        %1128 = vmatpush.bf16.msra.mxu0 0
        %1129 = vmatpush.bf16.msra.mxu0 0
        %1130 = vmatpush.bf16.msra.mxu0 0
        %1131 = vmatpush.bf16.msra.mxu0 0
        %1132 = vmatpush.bf16.msra.mxu0 %v1120
        %1133 = vmatpush.bf16.msra.mxu0 %v1119
        %1134 = vmatmul.bf16.gmra.mxu0 %v1124
        %v1135 = vpop.f32.mrf.mxu0
        %v1136 = vadd.f32 %v1109, %v1135
        %v1137 = vpop.f32.mrf.mxu0
        %1138 = vdwg.mxu0
        %v1139 = vadd.f32 %v782, %v1136
        %v1140 = vld [vmem:[%s763] sm:$0x1]
        %v1141 = vld [vmem:[%s638] sm:$0x1]
        %v1142 = vsel %vm785, %v1139, 0.0
        %1143 = vadd.xlane.f32.xlu0 %v1142
        %v1144 = vpop.xlane.xlu0 %1143
        %v1145 = vmul.f32 %v1144, %v795
        %v1146 = vsub.f32 %v1139, %v1145
        %v1147 = vmul.f32 %v1146, %v1146
        %v1148 = vsel %vm785, %v1147, 0.0
        %1149 = vadd.xlane.f32.xlu0 %v1148
        %v1150 = vpop.xlane.xlu0 %1149
        %v1151 = vmul.f32 %v1150, %v795
        %v1152 = vadd.f32 %v1151, 1e-05
        %v1153 = vrsqrt.pop %v1152
        %v1154 = vmul.f32 %v1153, %v1152
        %v1155 = vmul.f32 %v1154, %v1153
        %v1156 = vmul.f32 0.5, %v1155
        %v1157 = vsub.f32 1.5, %v1156
        %v1158 = vmul.f32 %v1153, %v1157
        %vm1159 = vweird.f32 %v1152
        %vm1160 = vweird.f32 %v1153
        %vm1161 = vmor %vm1159, %vm1160
        %v1162 = vsel %vm1161, %v1153, %v1158
        %v1163 = vmul.f32 %v1146, %v1162
        %v1165 = vperm.slane %v1140, 0
        %v1167 = vmul.f32 %v1163, %v1165
        %v1169 = vperm.slane %v1141, 0
        %v1171 = vadd.f32 %v1167, %v1169
        %v1172 = vpack.c.bf16 %v1171, %v1171
        %v1173 = vld [vmem:[%s768] sm:$0xf]
        %v1174 = vld [vmem:[%s768 + $0x4] sm:$0xf]
        %v1175 = vld [vmem:[%s768 + $0x8] sm:$0xf]
        %v1176 = vld [vmem:[%s768 + $0xc] sm:$0xf]
        %v1177 = vld [vmem:[%s647] sm:$0x1]
        %v1179 = vperm.slane %v1177, 0
        %v1185 = vunpack.c.l.b16 %v1173
        %v1186 = vunpack.c.l.b16 %v1174
        %v1187 = vunpack.c.l.b16 %v1175
        %v1188 = vunpack.c.l.b16 %v1176
        %v1189 = vpack.c.b16 %v1186, %v1185
        %v1190 = vpack.c.b16 %v1188, %v1187
        %v1194 = vsel %vm785, %v1172, 0
        %1196 = vmatpush.bf16.msra.mxu0 0
        %1197 = vmatpush.bf16.msra.mxu0 0
        %1198 = vmatpush.bf16.msra.mxu0 0
        %1199 = vmatpush.bf16.msra.mxu0 0
        %1200 = vmatpush.bf16.msra.mxu0 0
        %1201 = vmatpush.bf16.msra.mxu0 0
        %1202 = vmatpush.bf16.msra.mxu0 %v1190
        %1203 = vmatpush.bf16.msra.mxu0 %v1189
        %1204 = vmatmul.bf16.gmra.mxu0 %v1194
        %v1205 = vpop.f32.mrf.mxu0
        %v1206 = vadd.f32 %v1179, %v1205
        %v1207 = vpop.f32.mrf.mxu0
        %1208 = vdwg.mxu0
        %v1209 = vmul.f32 %v1206, 0.5
        %v1210 = vrcp.pop 1.4142135
        %v1211 = vmul.f32 1.4142135, %v1210
        %v1212 = vsub.f32 1.0, %v1211
        %v1213 = vmul.f32 %v1210, %v1212
        %v1214 = vadd.f32 %v1210, %v1213
        %vm1215 = vweird.f32 %v1210
        %v1216 = vsel %vm1215, %v1210, %v1214
        %v1217 = vmul.f32 %v1206, %v1216
        %v1218 = vmul.f32 %v1217, %v1217
        %v1219 = vmin.f32 16.0, %v1218
        %v1220 = vmul.f32 %v1219, 2.1237322e-06
        %v1221 = vadd.f32 %v1220, 0.00028619796
        %v1222 = vmul.f32 %v1219, %v1221
        %v1223 = vadd.f32 %v1222, 0.0036580483
        %v1224 = vmul.f32 %v1219, %v1223
        %v1225 = vadd.f32 %v1224, 0.05243302
        %v1226 = vmul.f32 %v1219, %v1225
        %v1227 = vadd.f32 %v1226, 0.18741608
        %v1228 = vmul.f32 %v1219, %v1227
        %v1229 = vadd.f32 %v1228, 1.1283791
        %v1230 = vmul.f32 %v1217, %v1229
        %v1231 = vmul.f32 %v1219, 3.8918573e-05
        %v1232 = vadd.f32 %v1231, 0.001143296
        %v1233 = vmul.f32 %v1219, %v1232
        %v1234 = vadd.f32 %v1233, 0.014752088
        %v1235 = vmul.f32 %v1219, %v1234
        %v1236 = vadd.f32 %v1235, 0.112945676
        %v1237 = vmul.f32 %v1219, %v1236
        %v1238 = vadd.f32 %v1237, 0.4994258
        %v1239 = vmul.f32 %v1219, %v1238
        %v1240 = vadd.f32 %v1239, 1.0
        %v1241 = vrcp.pop %v1240
        %v1242 = vmul.f32 %v1240, %v1241
        %v1243 = vsub.f32 1.0, %v1242
        %v1244 = vmul.f32 %v1241, %v1243
        %v1245 = vadd.f32 %v1241, %v1244
        %vm1246 = vweird.f32 %v1240
        %vm1247 = vweird.f32 %v1241
        %vm1248 = vmor %vm1246, %vm1247
        %v1249 = vsel %vm1248, %v1241, %v1245
        %v1250 = vand.u32 2147483647, %v1240
        %vm1251 = vcmp.eq.f32.partialorder %v1250, 8.507059e+37
        %v1252 = vand.u32 %v1240, 2147483648
        %v1253 = vor.u32 1.1754944e-38, %v1252
        %v1254 = vsel %vm1251, %v1253, %v1249
        %v1255 = vmul.f32 %v1230, %v1254
        %v1256 = vmin.f32 %v1255, 1.0
        %v1257 = vmax.f32 %v1256, -1.0
        %v1258 = vadd.f32 %v1257, 1.0
        %v1259 = vmul.f32 %v1209, %v1258
        %v1260 = vpack.c.bf16 %v1259, %v1259
        %v1261 = vld [vmem:[%s773] sm:$0xf]
        %v1262 = vld [vmem:[%s773 + $0x4] sm:$0xf]
        %v1263 = vld [vmem:[%s773 + $0x8] sm:$0xf]
        %v1264 = vld [vmem:[%s773 + $0xc] sm:$0xf]
        %v1265 = vld [vmem:[%s773 + $0x10] sm:$0xf]
        %v1266 = vld [vmem:[%s773 + $0x14] sm:$0xf]
        %v1267 = vld [vmem:[%s773 + $0x18] sm:$0xf]
        %v1268 = vld [vmem:[%s773 + $0x1c] sm:$0xf]
        %v1269 = vld [vmem:[%s656] sm:$0x1]
        %v1271 = vperm.slane %v1269, 0
        %v1281 = vunpack.c.l.b16 %v1261
        %v1282 = vunpack.c.l.b16 %v1262
        %v1283 = vunpack.c.l.b16 %v1263
        %v1284 = vunpack.c.l.b16 %v1264
        %v1285 = vunpack.c.l.b16 %v1265
        %v1286 = vunpack.c.l.b16 %v1266
        %v1287 = vunpack.c.l.b16 %v1267
        %v1288 = vunpack.c.l.b16 %v1268
        %v1289 = vpack.c.b16 %v1282, %v1281
        %v1290 = vpack.c.b16 %v1284, %v1283
        %v1291 = vpack.c.b16 %v1286, %v1285
        %v1292 = vpack.c.b16 %v1288, %v1287
        %vm1297 = vcmask 523264
        %v1299 = vsel %vm1297, %v1260, 0
        %1301 = vmatpush.bf16.msra.mxu0 0
        %1302 = vmatpush.bf16.msra.mxu0 0
        %1303 = vmatpush.bf16.msra.mxu0 0
        %1304 = vmatpush.bf16.msra.mxu0 0
        %1305 = vmatpush.bf16.msra.mxu0 %v1292
        %1306 = vmatpush.bf16.msra.mxu0 %v1291
        %1307 = vmatpush.bf16.msra.mxu0 %v1290
        %1308 = vmatpush.bf16.msra.mxu0 %v1289
        %1309 = vmatmul.bf16.gmra.mxu0 %v1299
        %v1310 = vpop.f32.mrf.mxu0
        %v1311 = vadd.f32 %v1271, %v1310
        %v1312 = vpop.f32.mrf.mxu0
        %1313 = vdwg.mxu0
        %v1314 = vadd.f32 %v1139, %v1311
        %1315 = vst.msk [vmem:[#allocation2] sm:$0xff] %vm785, %v1314
        %p1316 = scmp.eq.s32.totalorder %s45, 1
        // Predicated region
        $region105: #{transformer_forward.1} parent=75 // pred_check
          %p1317 = pneg %p1316
        $region106: #{transformer_forward.1} parent=75 // pred_check_branch
          %1319 = sbr.rel (%p1317) target = $region108
        $region107: #{transformer_forward.1} parent=75 // pred_region
          %v1320 = vld [vmem:[%s12] sm:$0x1]
          %v1321 = vld [vmem:[%s13] sm:$0x1]
          %v1322 = vsel %vm785, %v1314, 0.0
          %1323 = vadd.xlane.f32.xlu0 %v1322
          %v1324 = vpop.xlane.xlu0 %1323
          %v1325 = vmul.f32 %v1324, %v795
          %v1326 = vsub.f32 %v1314, %v1325
          %v1327 = vmul.f32 %v1326, %v1326
          %v1328 = vsel %vm785, %v1327, 0.0
          %1329 = vadd.xlane.f32.xlu0 %v1328
          %v1330 = vpop.xlane.xlu0 %1329
          %v1331 = vmul.f32 %v1330, %v795
          %v1332 = vadd.f32 %v1331, 1e-05
          %v1333 = vrsqrt.pop %v1332
          %v1334 = vmul.f32 %v1333, %v1332
          %v1335 = vmul.f32 %v1334, %v1333
          %v1336 = vmul.f32 0.5, %v1335
          %v1337 = vsub.f32 1.5, %v1336
          %v1338 = vmul.f32 %v1333, %v1337
          %vm1339 = vweird.f32 %v1332
          %vm1340 = vweird.f32 %v1333
          %vm1341 = vmor %vm1339, %vm1340
          %v1342 = vsel %vm1341, %v1333, %v1338
          %v1343 = vmul.f32 %v1326, %v1342
          %v1345 = vperm.slane %v1320, 0
          %v1347 = vmul.f32 %v1343, %v1345
          %v1349 = vperm.slane %v1321, 0
          %v1351 = vadd.f32 %v1347, %v1349
          %1352 = vst.msk [vmem:[%s747] sm:$0xff] %vm785, %v1351
        $region108: #{transformer_forward.1} parent=75 // pred_fallthru
          _
        %s1353 = sand.u32 %s414, 1
        %s1354 = scalar_lea.sflag [#allocation5], %s1353
        %s1355 = sand.u32 %s414, 1
        %s1356 = smul.addr %s1355, 8
        %s1357 = scalar_lea.vmem [#allocation14], %s1356
        // Predicated region
        $region109: #{transformer_forward.1} parent=75 // pred_check
          %p1358 = pneg %p424
        $region110: #{transformer_forward.1} parent=75 // pred_check_branch
          %1360 = sbr.rel (%p1358) target = $region112
        $region111: #{transformer_forward.1} parent=75 // pred_region
          %1362 = vsyncadd %s1354, 0
          %s1363 = smul.addr %s44, 8
          %s1364 = scalar_lea.hbm %s14, %s1363
          %s1366 = sshll.u32 %s1357, 4
          %s1367 = int_to_ptr.vmem [resolvable:$true] %s1366
          %s1368 = sshll.u32 %s1364, 4
          %s1369 = int_to_ptr.hbm [resolvable:$true] %s1368
          %1371 = dma.vmem_to_hbm [thread:$0]  %s1367, 128, %s1369, %s1354
        $region112: #{transformer_forward.1} parent=75 // pred_fallthru
          _
      $region76: #{transformer_forward.1} parent=5 // pred_fallthru
        _
      %p1372 = scmp.le.s32.totalorder 2, %s35
      // Predicated region
      $region113: #{transformer_forward.1} parent=5 // pred_check
        %p1373 = pneg %p1372
      $region114: #{transformer_forward.1} parent=5 // pred_check_branch
        %1375 = sbr.rel (%p1373) target = $region116
      $region115: #{transformer_forward.1} parent=5 // pred_region
        %s1376 = ssub.s32 %s35, 2
        // Predicated region
        $region117: #{transformer_forward.1} parent=115 // pred_check
          %p1377 = pneg %p430
        $region118: #{transformer_forward.1} parent=115 // pred_check_branch
          %1379 = sbr.rel (%p1377) target = $region120
        $region119: #{transformer_forward.1} parent=115 // pred_region
          %s1380 = sand.u32 %s415, 1
          %s1381 = scalar_lea.sflag [#allocation5], %s1380
          %s1382 = sand.u32 %s415, 1
          %s1383 = smul.addr %s1382, 8
          %s1384 = scalar_lea.vmem [#allocation14], %s1383
          %1386 = dma.done %s1381, 128
        $region120: #{transformer_forward.1} parent=115 // pred_fallthru
          _
      $region116: #{transformer_forward.1} parent=5 // pred_fallthru
        _
    $region6: #{transformer_forward.1} parent=1 // loop_footer
      %s39 = sadd.s32 1, %s35
    $region7: #{transformer_forward.1} parent=1 // loop_footer_branch
      %34 = sbr.rel target = $region3
    $region8: #{transformer_forward.1} parent=1 // loop_exit
      _
    %1387 = vsyncpa [#allocation4], 1
    %s1388 = scalar_lea.sflag [#allocation4], 1
    %1389 = vsyncpa %s1388, 1
    %1390 = vsyncpa [#allocation7], 1
    %s1391 = scalar_lea.sflag [#allocation7], 1
    %1392 = vsyncpa %s1391, 1
    %1393 = vsyncpa [#allocation10], 1
    %s1394 = scalar_lea.sflag [#allocation10], 1
    %1395 = vsyncpa %s1394, 1
    %1396 = vsyncpa [#allocation13], 1
    %s1397 = scalar_lea.sflag [#allocation13], 1
    %1398 = vsyncpa %s1397, 1
    %1399 = vsyncpa [#allocation5], 1
    %s1400 = scalar_lea.sflag [#allocation5], 1
    %1401 = vsyncpa %s1400, 1

</llo_original>
